<compile_context>
chip_gen: v7x
topology: tpu7x:2x2x1
jax: 0.10.0
libtpu: 0.0.40
codegen_flags: <defaults>
</compile_context>

<pallas_src>
import functools
import math

import jax
import jax.numpy as jnp
from jax.experimental import pallas as pl
from jax.experimental.pallas import tpu as pltpu

# ---------------- small synthetic BERT config ----------------
VOCAB = 64
VOCAB_PAD = 128            # classifier padded to a full lane width
HIDDEN = 32
NUM_HEADS = 4
HEAD_DIM = HIDDEN // NUM_HEADS
NUM_LAYERS = 2
INTERMEDIATE = 64
MAX_POS = 16
LN_EPS = 1e-12

# ---- layout of the packed f32 vector blob (rows x 128 lanes) ----
R_EMB_G, R_EMB_B, R_TYPE, R_BC = 0, 1, 2, 3
R_POS = 4
R_LAYERS = R_POS + MAX_POS
ROWS_PER_LAYER = 8          # bqkv, bo, ln1_g, ln1_b, b1, b2, ln2_g, ln2_b
BLOB_ROWS = ((R_LAYERS + NUM_LAYERS * ROWS_PER_LAYER + 7) // 8) * 8


# ---------------- in-kernel helpers ----------------
def _layer_norm(h, g, b):
    mu = jnp.mean(h, axis=-1, keepdims=True)
    var = jnp.mean((h - mu) * (h - mu), axis=-1, keepdims=True)
    return (h - mu) * jax.lax.rsqrt(var + LN_EPS) * g + b


def _gelu(h):
    # tanh approximation (EUP tanh); see TODO(synk) above
    return 0.5 * h * (1.0 + jnp.tanh(0.7978845608028654 * (h + 0.044715 * h * h * h)))


def _encode_logits(x_ids_ref, word_emb_ref, wqkv_ref, wo_ref, w1_ref, w2_ref,
                   wc_ref, blob_ref, *, B, S):
    """Runs embeddings + encoder + classifier for the WHOLE folded batch.

    Returns (B*S, VOCAB_PAD) f32 logits (pad columns ~= -1e30).
    """
    BS = B * S
    blob = blob_ref[...]                                        # (BLOB_ROWS, 128) f32

    def vrow(r, w):
        return blob[r:r + 1, :w]                                # (1, w) f32

    # --- embedding lookup in-kernel (one-hot matmul gather) ---
    ids = x_ids_ref[...]                                        # (BS, 1) int32
    vcols = jax.lax.broadcasted_iota(jnp.int32, (BS, VOCAB), 1)
    onehot = (vcols == ids).astype(jnp.float32)                 # (BS, VOCAB)
    word = jnp.dot(onehot, word_emb_ref[...],
                   preferred_element_type=jnp.float32)          # (BS, H)
    pos_s = blob[R_POS:R_POS + S, :HIDDEN]                      # (S, H)
    pos = jnp.concatenate([pos_s] * B, axis=0)                  # (BS, H)
    h = word + pos + vrow(R_TYPE, HIDDEN)                       # + type_emb[0]
    h = _layer_norm(h, vrow(R_EMB_G, HIDDEN), vrow(R_EMB_B, HIDDEN))

    # --- block-diagonal causal additive bias (batch folded) ---
    row = jax.lax.broadcasted_iota(jnp.int32, (BS, BS), 0)
    col = jax.lax.broadcasted_iota(jnp.int32, (BS, BS), 1)
    same_seq = (row & (-S)) == (col & (-S))                     # S is a power of two
    allowed = jnp.logical_and(col <= row, same_seq)
    bias = jnp.where(allowed, 0.0, -10000.0).astype(jnp.float32)

    scale = 1.0 / math.sqrt(HEAD_DIM)

    for l in range(NUM_LAYERS):
        base = R_LAYERS + l * ROWS_PER_LAYER

        # fused Q/K/V projection: one MXU push, 3x wider N
        qkv = jnp.dot(h.astype(jnp.bfloat16), wqkv_ref[l],
                      preferred_element_type=jnp.float32) + vrow(base + 0, 3 * HIDDEN)
        q = qkv[:, 0:HIDDEN]
        k = qkv[:, HIDDEN:2 * HIDDEN]
        v = qkv[:, 2 * HIDDEN:3 * HIDDEN]

        # per-head attention; output projection hoisted out of the loop
        ctx_heads = []
        for hh in range(NUM_HEADS):
            sl = slice(hh * HEAD_DIM, (hh + 1) * HEAD_DIM)
            qh = q[:, sl].astype(jnp.bfloat16)
            kh = k[:, sl].astype(jnp.bfloat16)
            vh = v[:, sl].astype(jnp.bfloat16)
            sc = jax.lax.dot_general(qh, kh, (((1,), (1,)), ((), ())),
                                     preferred_element_type=jnp.float32) * scale
            sc = sc + bias
            m = jnp.max(sc, axis=-1, keepdims=True)
            p = jnp.exp(sc - m)
            p = p * pl.reciprocal(jnp.sum(p, axis=-1, keepdims=True), approx=True)
            ctx_heads.append(jnp.dot(p.astype(jnp.bfloat16), vh,
                                     preferred_element_type=jnp.float32))   # (BS, Dh)
        ctx = jnp.concatenate(ctx_heads, axis=-1)                            # (BS, H)
        attn = jnp.dot(ctx.astype(jnp.bfloat16), wo_ref[l],
                       preferred_element_type=jnp.float32) + vrow(base + 1, HIDDEN)

        h = _layer_norm(attn + h, vrow(base + 2, HIDDEN), vrow(base + 3, HIDDEN))

        inter = jnp.dot(h.astype(jnp.bfloat16), w1_ref[l],
                        preferred_element_type=jnp.float32) + vrow(base + 4, INTERMEDIATE)
        inter = _gelu(inter)
        ffn = jnp.dot(inter.astype(jnp.bfloat16), w2_ref[l],
                      preferred_element_type=jnp.float32) + vrow(base + 5, HIDDEN)
        h = _layer_norm(ffn + h, vrow(base + 6, HIDDEN), vrow(base + 7, HIDDEN))

    # lane-dense (128-wide) classifier; pad columns get a -1e30 bias
    logits = jnp.dot(h.astype(jnp.bfloat16), wc_ref[...],
                     preferred_element_type=jnp.float32) + vrow(R_BC, VOCAB_PAD)
    return logits                                                            # (BS, 128)


# ---------------- fused kernels (single invocation, whole batch) ----------------
def _lm_infer_kernel(x_ids_ref, word_emb_ref, wqkv_ref, wo_ref, w1_ref, w2_ref,
                     wc_ref, blob_ref, probs_ref, *, B, S):
    logits = _encode_logits(x_ids_ref, word_emb_ref, wqkv_ref, wo_ref, w1_ref,
                            w2_ref, wc_ref, blob_ref, B=B, S=S)
    m = jnp.max(logits, axis=-1, keepdims=True)
    e = jnp.exp(logits - m)
    # exact divide here keeps the softmax normalization tight for validation
    probs_ref[...] = e / jnp.sum(e, axis=-1, keepdims=True)


def _lm_loss_kernel(x_ids_ref, word_emb_ref, wqkv_ref, wo_ref, w1_ref, w2_ref,
                    wc_ref, blob_ref, y_ref, out_ref, *, B, S):
    logits = _encode_logits(x_ids_ref, word_emb_ref, wqkv_ref, wo_ref, w1_ref,
                            w2_ref, wc_ref, blob_ref, B=B, S=S)
    BS = B * S
    y = y_ref[...]                                                # (BS, 1) int32
    m = jnp.max(logits, axis=-1, keepdims=True)
    lse = m + jnp.log(jnp.sum(jnp.exp(logits - m), axis=-1, keepdims=True))
    cols = jax.lax.broadcasted_iota(jnp.int32, (BS, VOCAB_PAD), 1)
    onehot = (cols == y).astype(jnp.float32)
    tgt = jnp.sum(logits * onehot, axis=-1, keepdims=True)
    valid = (y != -1).astype(jnp.float32)                         # ignore_index=-1
    loss_sum = jnp.sum((lse - tgt) * valid, axis=0, keepdims=True)   # (1, 1)
    valid_sum = jnp.sum(valid, axis=0, keepdims=True)                # (1, 1)
    # single lane-dense output row: lane 0 = sum(loss), lane 1 = sum(valid)
    lane = jax.lax.broadcasted_iota(jnp.int32, (1, 128), 1)
    out_ref[...] = jnp.where(lane == 0, loss_sum,
                             jnp.where(lane == 1, valid_sum, 0.0))


# ---------------- wrappers ----------------
_CPARAMS = pltpu.CompilerParams(vmem_limit_bytes=32 * 1024 * 1024)


def language_model_forward(params, x, y=None):
    B, S = x.shape
    assert S & (S - 1) == 0, "in-kernel block-diag mask assumes power-of-two S"
    BS = B * S
    x_ids = x.reshape(BS, 1).astype(jnp.int32)
    args = (x_ids, params["word_emb"], params["wqkv"], params["wo"],
            params["w1"], params["w2"], params["wc"], params["blob"])

    if y is None:
        probs = pl.pallas_call(
            functools.partial(_lm_infer_kernel, B=B, S=S),
            out_shape=jax.ShapeDtypeStruct((BS, VOCAB_PAD), jnp.float32),
            compiler_params=_CPARAMS,
        )(*args)
        return probs.reshape(B, S, VOCAB_PAD)[:, :, :VOCAB]

    y_ids = y.reshape(BS, 1).astype(jnp.int32)
    out = pl.pallas_call(
        functools.partial(_lm_loss_kernel, B=B, S=S),
        out_shape=jax.ShapeDtypeStruct((1, 128), jnp.float32),
        compiler_params=_CPARAMS,
    )(*args, y_ids)
    # guard against an all-ignored batch (PyTorch would return NaN here)
    return out[0, 0] / jnp.maximum(out[0, 1], 1.0)


@jax.jit
def lm_infer(params, x):
    return language_model_forward(params, x, None)


@jax.jit
def lm_loss(params, x, y):
    return language_model_forward(params, x, y)


# ---------------- parameters (synthetic, deterministic) ----------------
def init_params(seed=0):
    key = jax.random.PRNGKey(seed)
    counter = [0]

    def W(shape, dtype=jnp.float32):
        counter[0] += 1
        w = jax.random.normal(jax.random.fold_in(key, counter[0]), shape, jnp.float32) * 0.02
        return w.astype(dtype)

    L = NUM_LAYERS
    word_emb = W((VOCAB, HIDDEN))
    pos_emb = W((MAX_POS, HIDDEN))
    type_emb = W((2, HIDDEN))

    # classifier padded to 128 lanes: pad weights 0, pad bias -1e30 (=> prob 0)
    wc_real = W((HIDDEN, VOCAB), jnp.float32)
    wc = jnp.zeros((HIDDEN, VOCAB_PAD), jnp.float32).at[:, :VOCAB].set(wc_real)
    wc = wc.astype(jnp.bfloat16)
    bc = jnp.full((VOCAB_PAD,), -1e30, jnp.float32).at[:VOCAB].set(0.0)

    # single packed f32 blob for all small vectors (biases, LN, pos/type emb, bc)
    blob = jnp.zeros((BLOB_ROWS, 128), jnp.float32)

    def setrow(b, r, v):
        v = jnp.asarray(v, jnp.float32).reshape(-1)
        return b.at[r, :v.shape[0]].set(v)

    blob = setrow(blob, R_EMB_G, jnp.ones((HIDDEN,)))
    blob = setrow(blob, R_EMB_B, jnp.zeros((HIDDEN,)))
    blob = setrow(blob, R_TYPE, type_emb[0])
    blob = setrow(blob, R_BC, bc)
    for p in range(MAX_POS):
        blob = setrow(blob, R_POS + p, pos_emb[p])
    for l in range(L):
        base = R_LAYERS + l * ROWS_PER_LAYER
        blob = setrow(blob, base + 0, jnp.zeros((3 * HIDDEN,)))      # bqkv
        blob = setrow(blob, base + 1, jnp.zeros((HIDDEN,)))          # bo
        blob = setrow(blob, base + 2, jnp.ones((HIDDEN,)))           # ln1_g
        blob = setrow(blob, base + 3, jnp.zeros((HIDDEN,)))          # ln1_b
        blob = setrow(blob, base + 4, jnp.zeros((INTERMEDIATE,)))    # b1
        blob = setrow(blob, base + 5, jnp.zeros((HIDDEN,)))          # b2
        blob = setrow(blob, base + 6, jnp.ones((HIDDEN,)))           # ln2_g
        blob = setrow(blob, base + 7, jnp.zeros((HIDDEN,)))          # ln2_b

    return {
        "word_emb": word_emb,                                  # (V, H) f32
        "wqkv": W((L, HIDDEN, 3 * HIDDEN), jnp.bfloat16),
        "wo": W((L, HIDDEN, HIDDEN), jnp.bfloat16),
        "w1": W((L, HIDDEN, INTERMEDIATE), jnp.bfloat16),
        "w2": W((L, INTERMEDIATE, HIDDEN), jnp.bfloat16),
        "wc": wc,                                              # (H, 128) bf16
        "blob": blob,                                          # (BLOB_ROWS, 128) f32
    }


# ---------------- demo ----------------
if __name__ == "__main__":
    B, S = 2, 8
    key = jax.random.PRNGKey(0)
    params = init_params(0)

    x = jax.random.randint(jax.random.fold_in(key, 100), (B, S), 0, VOCAB, jnp.int32)
    y = jax.random.randint(jax.random.fold_in(key, 101), (B, S), 0, VOCAB, jnp.int32)
    y = y.at[:, 0].set(-1)  # exercise ignore_index=-1

    probs = lm_infer(params, x)      # inference path: softmax probabilities
    loss = lm_loss(params, x, y)     # training path: masked CE loss
    jax.block_until_ready((probs, loss))

    assert probs.shape == (B, S, VOCAB)
    assert bool(jnp.all(jnp.isfinite(probs)))
    assert bool(jnp.allclose(jnp.sum(probs, axis=-1), 1.0, atol=1e-3))
    assert bool(jnp.isfinite(loss))

    # consistency check: CE loss must equal -mean log prob of the targets
    probs_flat = probs.reshape(B * S, VOCAB)
    y_flat = y.reshape(B * S)
    valid = (y_flat != -1).astype(jnp.float32)
    safe_y = jnp.where(y_flat != -1, y_flat, 0)
    tgt_p = probs_flat[jnp.arange(B * S), safe_y]
    ref_loss = -jnp.sum(jnp.log(tgt_p) * valid) / jnp.maximum(jnp.sum(valid), 1.0)
    assert abs(float(loss) - float(ref_loss)) < 5e-3

    print("KERNEL_OK")
</pallas_src>

<mosaic_0001>
module attributes {stable_mosaic.version = 11 : i64} {
  func.func @_lm_infer_kernel(%arg0: memref<16x1xi32, #tpu.memory_space<vmem>>, %arg1: memref<64x32xf32, #tpu.memory_space<vmem>>, %arg2: memref<2x32x96xbf16, #tpu.memory_space<vmem>>, %arg3: memref<2x32x32xbf16, #tpu.memory_space<vmem>>, %arg4: memref<2x32x64xbf16, #tpu.memory_space<vmem>>, %arg5: memref<2x64x32xbf16, #tpu.memory_space<vmem>>, %arg6: memref<32x128xbf16, #tpu.memory_space<vmem>>, %arg7: memref<40x128xf32, #tpu.memory_space<vmem>>, %arg8: memref<16x128xf32, #tpu.memory_space<vmem>>) attributes {dimension_semantics = [], scalar_prefetch = 0 : i64, scratch_operands = 0 : i64, tpu.core_type = #tpu.core_type<tc>} {
    %c0 = arith.constant 0 : index
    %c0_0 = arith.constant 0 : index
    %0 = vector.load %arg7[%c0, %c0_0] : memref<40x128xf32, #tpu.memory_space<vmem>>, vector<40x128xf32>
    %c0_1 = arith.constant 0 : index
    %c0_2 = arith.constant 0 : index
    %1 = vector.load %arg0[%c0_1, %c0_2] : memref<16x1xi32, #tpu.memory_space<vmem>>, vector<16x1xi32>
    %2 = tpu.iota {dimensions = array<i32: 1>} : vector<16x64xi32>
    %3 = vector.broadcast %1 : vector<16x1xi32> to vector<16x64xi32>
    %4 = arith.cmpi eq, %2, %3 : vector<16x64xi32>
    %5 = arith.extui %4 : vector<16x64xi1> to vector<16x64xi32>
    %6 = arith.sitofp %5 : vector<16x64xi32> to vector<16x64xf32>
    %c0_3 = arith.constant 0 : index
    %c0_4 = arith.constant 0 : index
    %7 = vector.load %arg1[%c0_3, %c0_4] : memref<64x32xf32, #tpu.memory_space<vmem>>, vector<64x32xf32>
    %cst = arith.constant dense<0.000000e+00> : vector<16x32xf32>
    %8 = tpu.matmul %6, %7, %cst {dimension_numbers = #tpu.dot_dimension_numbers<[1], [0], [0], [1], [0, 0, 1, 1], [], []>} : vector<16x64xf32>, vector<64x32xf32>, vector<16x32xf32> -> vector<16x32xf32>
    %9 = vector.extract_strided_slice %0 {offsets = [4, 0], sizes = [8, 32], strides = [1, 1]} : vector<40x128xf32> to vector<8x32xf32>
    %10 = tpu.concatenate %9, %9 in 0 : vector<8x32xf32>, vector<8x32xf32> -> vector<16x32xf32>
    %11 = arith.addf %8, %10 : vector<16x32xf32>
    %12 = vector.extract_strided_slice %0 {offsets = [2, 0], sizes = [1, 32], strides = [1, 1]} : vector<40x128xf32> to vector<1x32xf32>
    %13 = vector.broadcast %12 : vector<1x32xf32> to vector<16x32xf32>
    %14 = arith.addf %11, %13 : vector<16x32xf32>
    %15 = vector.extract_strided_slice %0 {offsets = [0, 0], sizes = [1, 32], strides = [1, 1]} : vector<40x128xf32> to vector<1x32xf32>
    %16 = vector.extract_strided_slice %0 {offsets = [1, 0], sizes = [1, 32], strides = [1, 1]} : vector<40x128xf32> to vector<1x32xf32>
    %cst_5 = arith.constant dense<0.000000e+00> : vector<16xf32>
    %17 = vector.multi_reduction <add>, %14, %cst_5 [1] : vector<16x32xf32> to vector<16xf32>
    %18 = vector.shape_cast %17 : vector<16xf32> to vector<16x1xf32>
    %cst_6 = arith.constant 3.200000e+01 : f32
    %19 = vector.broadcast %cst_6 : f32 to vector<16x1xf32>
    %20 = arith.divf %18, %19 : vector<16x1xf32>
    %21 = vector.broadcast %20 : vector<16x1xf32> to vector<16x32xf32>
    %22 = arith.subf %14, %21 : vector<16x32xf32>
    %23 = vector.broadcast %20 : vector<16x1xf32> to vector<16x32xf32>
    %24 = arith.subf %14, %23 : vector<16x32xf32>
    %25 = arith.mulf %22, %24 : vector<16x32xf32>
    %cst_7 = arith.constant dense<0.000000e+00> : vector<16xf32>
    %26 = vector.multi_reduction <add>, %25, %cst_7 [1] : vector<16x32xf32> to vector<16xf32>
    %27 = vector.shape_cast %26 : vector<16xf32> to vector<16x1xf32>
    %cst_8 = arith.constant 3.200000e+01 : f32
    %28 = vector.broadcast %cst_8 : f32 to vector<16x1xf32>
    %29 = arith.divf %27, %28 : vector<16x1xf32>
    %30 = vector.broadcast %20 : vector<16x1xf32> to vector<16x32xf32>
    %31 = arith.subf %14, %30 : vector<16x32xf32>
    %cst_9 = arith.constant 9.99999996E-13 : f32
    %32 = vector.broadcast %cst_9 : f32 to vector<16x1xf32>
    %33 = arith.addf %29, %32 : vector<16x1xf32>
    %34 = math.rsqrt %33 : vector<16x1xf32>
    %35 = vector.broadcast %34 : vector<16x1xf32> to vector<16x32xf32>
    %36 = arith.mulf %31, %35 : vector<16x32xf32>
    %37 = vector.broadcast %15 : vector<1x32xf32> to vector<16x32xf32>
    %38 = arith.mulf %36, %37 : vector<16x32xf32>
    %39 = vector.broadcast %16 : vector<1x32xf32> to vector<16x32xf32>
    %40 = arith.addf %38, %39 : vector<16x32xf32>
    %41 = tpu.iota {dimensions = array<i32: 0>} : vector<16x16xi32>
    %42 = tpu.iota {dimensions = array<i32: 1>} : vector<16x16xi32>
    %c-8_i32 = arith.constant -8 : i32
    %43 = vector.broadcast %c-8_i32 : i32 to vector<16x16xi32>
    %44 = arith.andi %41, %43 : vector<16x16xi32>
    %c-8_i32_10 = arith.constant -8 : i32
    %45 = vector.broadcast %c-8_i32_10 : i32 to vector<16x16xi32>
    %46 = arith.andi %42, %45 : vector<16x16xi32>
    %47 = arith.cmpi eq, %44, %46 : vector<16x16xi32>
    %48 = arith.cmpi sle, %42, %41 : vector<16x16xi32>
    %49 = arith.andi %48, %47 : vector<16x16xi1>
    %cst_11 = arith.constant 0.000000e+00 : f32
    %cst_12 = arith.constant -1.000000e+04 : f32
    %50 = vector.broadcast %cst_11 : f32 to vector<16x16xf32>
    %51 = vector.broadcast %cst_12 : f32 to vector<16x16xf32>
    %52 = arith.select %49, %50, %51 : vector<16x16xi1>, vector<16x16xf32>
    %53 = arith.truncf %40 : vector<16x32xf32> to vector<16x32xbf16>
    %c0_13 = arith.constant 0 : index
    %c0_14 = arith.constant 0 : index
    %c0_15 = arith.constant 0 : index
    %54 = vector.load %arg2[%c0_13, %c0_14, %c0_15] : memref<2x32x96xbf16, #tpu.memory_space<vmem>>, vector<1x32x96xbf16>
    %55 = vector.shape_cast %54 : vector<1x32x96xbf16> to vector<32x96xbf16>
    %cst_16 = arith.constant dense<0.000000e+00> : vector<16x96xf32>
    %56 = tpu.matmul %53, %55, %cst_16 {dimension_numbers = #tpu.dot_dimension_numbers<[1], [0], [0], [1], [0, 0, 1, 1], [], []>} : vector<16x32xbf16>, vector<32x96xbf16>, vector<16x96xf32> -> vector<16x96xf32>
    %57 = vector.extract_strided_slice %0 {offsets = [20, 0], sizes = [1, 96], strides = [1, 1]} : vector<40x128xf32> to vector<1x96xf32>
    %58 = vector.broadcast %57 : vector<1x96xf32> to vector<16x96xf32>
    %59 = arith.addf %56, %58 : vector<16x96xf32>
    %60 = vector.extract_strided_slice %59 {offsets = [0, 0], sizes = [16, 32], strides = [1, 1]} : vector<16x96xf32> to vector<16x32xf32>
    %61 = vector.extract_strided_slice %59 {offsets = [0, 32], sizes = [16, 32], strides = [1, 1]} : vector<16x96xf32> to vector<16x32xf32>
    %62 = vector.extract_strided_slice %59 {offsets = [0, 64], sizes = [16, 32], strides = [1, 1]} : vector<16x96xf32> to vector<16x32xf32>
    %63 = vector.extract_strided_slice %60 {offsets = [0, 0], sizes = [16, 8], strides = [1, 1]} : vector<16x32xf32> to vector<16x8xf32>
    %64 = arith.truncf %63 : vector<16x8xf32> to vector<16x8xbf16>
    %65 = vector.extract_strided_slice %61 {offsets = [0, 0], sizes = [16, 8], strides = [1, 1]} : vector<16x32xf32> to vector<16x8xf32>
    %66 = arith.truncf %65 : vector<16x8xf32> to vector<16x8xbf16>
    %67 = vector.extract_strided_slice %62 {offsets = [0, 0], sizes = [16, 8], strides = [1, 1]} : vector<16x32xf32> to vector<16x8xf32>
    %68 = arith.truncf %67 : vector<16x8xf32> to vector<16x8xbf16>
    %cst_17 = arith.constant dense<0.000000e+00> : vector<16x16xf32>
    %69 = tpu.matmul %64, %66, %cst_17 {dimension_numbers = #tpu.dot_dimension_numbers<[1], [1], [0], [0], [0, 0, 1, 0], [], []>} : vector<16x8xbf16>, vector<16x8xbf16>, vector<16x16xf32> -> vector<16x16xf32>
    %cst_18 = arith.constant 0.353553385 : f32
    %70 = vector.broadcast %cst_18 : f32 to vector<16x16xf32>
    %71 = arith.mulf %69, %70 : vector<16x16xf32>
    %72 = arith.addf %71, %52 : vector<16x16xf32>
    %cst_19 = arith.constant dense<0xFF800000> : vector<16xf32>
    %73 = vector.multi_reduction <maximumf>, %72, %cst_19 [1] : vector<16x16xf32> to vector<16xf32>
    %74 = vector.shape_cast %73 : vector<16xf32> to vector<16x1xf32>
    %75 = vector.broadcast %74 : vector<16x1xf32> to vector<16x16xf32>
    %76 = arith.subf %72, %75 : vector<16x16xf32>
    %77 = math.exp %76 : vector<16x16xf32>
    %cst_20 = arith.constant dense<0.000000e+00> : vector<16xf32>
    %78 = vector.multi_reduction <add>, %77, %cst_20 [1] : vector<16x16xf32> to vector<16xf32>
    %79 = vector.shape_cast %78 : vector<16xf32> to vector<16x1xf32>
    %80 = tpu.reciprocal %79 {approx = true} : vector<16x1xf32> -> vector<16x1xf32>
    %81 = vector.broadcast %80 : vector<16x1xf32> to vector<16x16xf32>
    %82 = arith.mulf %77, %81 : vector<16x16xf32>
    %83 = arith.truncf %82 : vector<16x16xf32> to vector<16x16xbf16>
    %cst_21 = arith.constant dense<0.000000e+00> : vector<16x8xf32>
    %84 = tpu.matmul %83, %68, %cst_21 {dimension_numbers = #tpu.dot_dimension_numbers<[1], [0], [0], [1], [0, 0, 1, 1], [], []>} : vector<16x16xbf16>, vector<16x8xbf16>, vector<16x8xf32> -> vector<16x8xf32>
    %85 = vector.extract_strided_slice %60 {offsets = [0, 8], sizes = [16, 8], strides = [1, 1]} : vector<16x32xf32> to vector<16x8xf32>
    %86 = arith.truncf %85 : vector<16x8xf32> to vector<16x8xbf16>
    %87 = vector.extract_strided_slice %61 {offsets = [0, 8], sizes = [16, 8], strides = [1, 1]} : vector<16x32xf32> to vector<16x8xf32>
    %88 = arith.truncf %87 : vector<16x8xf32> to vector<16x8xbf16>
    %89 = vector.extract_strided_slice %62 {offsets = [0, 8], sizes = [16, 8], strides = [1, 1]} : vector<16x32xf32> to vector<16x8xf32>
    %90 = arith.truncf %89 : vector<16x8xf32> to vector<16x8xbf16>
    %cst_22 = arith.constant dense<0.000000e+00> : vector<16x16xf32>
    %91 = tpu.matmul %86, %88, %cst_22 {dimension_numbers = #tpu.dot_dimension_numbers<[1], [1], [0], [0], [0, 0, 1, 0], [], []>} : vector<16x8xbf16>, vector<16x8xbf16>, vector<16x16xf32> -> vector<16x16xf32>
    %cst_23 = arith.constant 0.353553385 : f32
    %92 = vector.broadcast %cst_23 : f32 to vector<16x16xf32>
    %93 = arith.mulf %91, %92 : vector<16x16xf32>
    %94 = arith.addf %93, %52 : vector<16x16xf32>
    %cst_24 = arith.constant dense<0xFF800000> : vector<16xf32>
    %95 = vector.multi_reduction <maximumf>, %94, %cst_24 [1] : vector<16x16xf32> to vector<16xf32>
    %96 = vector.shape_cast %95 : vector<16xf32> to vector<16x1xf32>
    %97 = vector.broadcast %96 : vector<16x1xf32> to vector<16x16xf32>
    %98 = arith.subf %94, %97 : vector<16x16xf32>
    %99 = math.exp %98 : vector<16x16xf32>
    %cst_25 = arith.constant dense<0.000000e+00> : vector<16xf32>
    %100 = vector.multi_reduction <add>, %99, %cst_25 [1] : vector<16x16xf32> to vector<16xf32>
    %101 = vector.shape_cast %100 : vector<16xf32> to vector<16x1xf32>
    %102 = tpu.reciprocal %101 {approx = true} : vector<16x1xf32> -> vector<16x1xf32>
    %103 = vector.broadcast %102 : vector<16x1xf32> to vector<16x16xf32>
    %104 = arith.mulf %99, %103 : vector<16x16xf32>
    %105 = arith.truncf %104 : vector<16x16xf32> to vector<16x16xbf16>
    %cst_26 = arith.constant dense<0.000000e+00> : vector<16x8xf32>
    %106 = tpu.matmul %105, %90, %cst_26 {dimension_numbers = #tpu.dot_dimension_numbers<[1], [0], [0], [1], [0, 0, 1, 1], [], []>} : vector<16x16xbf16>, vector<16x8xbf16>, vector<16x8xf32> -> vector<16x8xf32>
    %107 = vector.extract_strided_slice %60 {offsets = [0, 16], sizes = [16, 8], strides = [1, 1]} : vector<16x32xf32> to vector<16x8xf32>
    %108 = arith.truncf %107 : vector<16x8xf32> to vector<16x8xbf16>
    %109 = vector.extract_strided_slice %61 {offsets = [0, 16], sizes = [16, 8], strides = [1, 1]} : vector<16x32xf32> to vector<16x8xf32>
    %110 = arith.truncf %109 : vector<16x8xf32> to vector<16x8xbf16>
    %111 = vector.extract_strided_slice %62 {offsets = [0, 16], sizes = [16, 8], strides = [1, 1]} : vector<16x32xf32> to vector<16x8xf32>
    %112 = arith.truncf %111 : vector<16x8xf32> to vector<16x8xbf16>
    %cst_27 = arith.constant dense<0.000000e+00> : vector<16x16xf32>
    %113 = tpu.matmul %108, %110, %cst_27 {dimension_numbers = #tpu.dot_dimension_numbers<[1], [1], [0], [0], [0, 0, 1, 0], [], []>} : vector<16x8xbf16>, vector<16x8xbf16>, vector<16x16xf32> -> vector<16x16xf32>
    %cst_28 = arith.constant 0.353553385 : f32
    %114 = vector.broadcast %cst_28 : f32 to vector<16x16xf32>
    %115 = arith.mulf %113, %114 : vector<16x16xf32>
    %116 = arith.addf %115, %52 : vector<16x16xf32>
    %cst_29 = arith.constant dense<0xFF800000> : vector<16xf32>
    %117 = vector.multi_reduction <maximumf>, %116, %cst_29 [1] : vector<16x16xf32> to vector<16xf32>
    %118 = vector.shape_cast %117 : vector<16xf32> to vector<16x1xf32>
    %119 = vector.broadcast %118 : vector<16x1xf32> to vector<16x16xf32>
    %120 = arith.subf %116, %119 : vector<16x16xf32>
    %121 = math.exp %120 : vector<16x16xf32>
    %cst_30 = arith.constant dense<0.000000e+00> : vector<16xf32>
    %122 = vector.multi_reduction <add>, %121, %cst_30 [1] : vector<16x16xf32> to vector<16xf32>
    %123 = vector.shape_cast %122 : vector<16xf32> to vector<16x1xf32>
    %124 = tpu.reciprocal %123 {approx = true} : vector<16x1xf32> -> vector<16x1xf32>
    %125 = vector.broadcast %124 : vector<16x1xf32> to vector<16x16xf32>
    %126 = arith.mulf %121, %125 : vector<16x16xf32>
    %127 = arith.truncf %126 : vector<16x16xf32> to vector<16x16xbf16>
    %cst_31 = arith.constant dense<0.000000e+00> : vector<16x8xf32>
    %128 = tpu.matmul %127, %112, %cst_31 {dimension_numbers = #tpu.dot_dimension_numbers<[1], [0], [0], [1], [0, 0, 1, 1], [], []>} : vector<16x16xbf16>, vector<16x8xbf16>, vector<16x8xf32> -> vector<16x8xf32>
    %129 = vector.extract_strided_slice %60 {offsets = [0, 24], sizes = [16, 8], strides = [1, 1]} : vector<16x32xf32> to vector<16x8xf32>
    %130 = arith.truncf %129 : vector<16x8xf32> to vector<16x8xbf16>
    %131 = vector.extract_strided_slice %61 {offsets = [0, 24], sizes = [16, 8], strides = [1, 1]} : vector<16x32xf32> to vector<16x8xf32>
    %132 = arith.truncf %131 : vector<16x8xf32> to vector<16x8xbf16>
    %133 = vector.extract_strided_slice %62 {offsets = [0, 24], sizes = [16, 8], strides = [1, 1]} : vector<16x32xf32> to vector<16x8xf32>
    %134 = arith.truncf %133 : vector<16x8xf32> to vector<16x8xbf16>
    %cst_32 = arith.constant dense<0.000000e+00> : vector<16x16xf32>
    %135 = tpu.matmul %130, %132, %cst_32 {dimension_numbers = #tpu.dot_dimension_numbers<[1], [1], [0], [0], [0, 0, 1, 0], [], []>} : vector<16x8xbf16>, vector<16x8xbf16>, vector<16x16xf32> -> vector<16x16xf32>
    %cst_33 = arith.constant 0.353553385 : f32
    %136 = vector.broadcast %cst_33 : f32 to vector<16x16xf32>
    %137 = arith.mulf %135, %136 : vector<16x16xf32>
    %138 = arith.addf %137, %52 : vector<16x16xf32>
    %cst_34 = arith.constant dense<0xFF800000> : vector<16xf32>
    %139 = vector.multi_reduction <maximumf>, %138, %cst_34 [1] : vector<16x16xf32> to vector<16xf32>
    %140 = vector.shape_cast %139 : vector<16xf32> to vector<16x1xf32>
    %141 = vector.broadcast %140 : vector<16x1xf32> to vector<16x16xf32>
    %142 = arith.subf %138, %141 : vector<16x16xf32>
    %143 = math.exp %142 : vector<16x16xf32>
    %cst_35 = arith.constant dense<0.000000e+00> : vector<16xf32>
    %144 = vector.multi_reduction <add>, %143, %cst_35 [1] : vector<16x16xf32> to vector<16xf32>
    %145 = vector.shape_cast %144 : vector<16xf32> to vector<16x1xf32>
    %146 = tpu.reciprocal %145 {approx = true} : vector<16x1xf32> -> vector<16x1xf32>
    %147 = vector.broadcast %146 : vector<16x1xf32> to vector<16x16xf32>
    %148 = arith.mulf %143, %147 : vector<16x16xf32>
    %149 = arith.truncf %148 : vector<16x16xf32> to vector<16x16xbf16>
    %cst_36 = arith.constant dense<0.000000e+00> : vector<16x8xf32>
    %150 = tpu.matmul %149, %134, %cst_36 {dimension_numbers = #tpu.dot_dimension_numbers<[1], [0], [0], [1], [0, 0, 1, 1], [], []>} : vector<16x16xbf16>, vector<16x8xbf16>, vector<16x8xf32> -> vector<16x8xf32>
    %151 = tpu.concatenate %84, %106, %128, %150 in 1 : vector<16x8xf32>, vector<16x8xf32>, vector<16x8xf32>, vector<16x8xf32> -> vector<16x32xf32>
    %152 = arith.truncf %151 : vector<16x32xf32> to vector<16x32xbf16>
    %c0_37 = arith.constant 0 : index
    %c0_38 = arith.constant 0 : index
    %c0_39 = arith.constant 0 : index
    %153 = vector.load %arg3[%c0_37, %c0_38, %c0_39] : memref<2x32x32xbf16, #tpu.memory_space<vmem>>, vector<1x32x32xbf16>
    %154 = vector.shape_cast %153 : vector<1x32x32xbf16> to vector<32x32xbf16>
    %cst_40 = arith.constant dense<0.000000e+00> : vector<16x32xf32>
    %155 = tpu.matmul %152, %154, %cst_40 {dimension_numbers = #tpu.dot_dimension_numbers<[1], [0], [0], [1], [0, 0, 1, 1], [], []>} : vector<16x32xbf16>, vector<32x32xbf16>, vector<16x32xf32> -> vector<16x32xf32>
    %156 = vector.extract_strided_slice %0 {offsets = [21, 0], sizes = [1, 32], strides = [1, 1]} : vector<40x128xf32> to vector<1x32xf32>
    %157 = vector.broadcast %156 : vector<1x32xf32> to vector<16x32xf32>
    %158 = arith.addf %155, %157 : vector<16x32xf32>
    %159 = arith.addf %158, %40 : vector<16x32xf32>
    %160 = vector.extract_strided_slice %0 {offsets = [22, 0], sizes = [1, 32], strides = [1, 1]} : vector<40x128xf32> to vector<1x32xf32>
    %161 = vector.extract_strided_slice %0 {offsets = [23, 0], sizes = [1, 32], strides = [1, 1]} : vector<40x128xf32> to vector<1x32xf32>
    %cst_41 = arith.constant dense<0.000000e+00> : vector<16xf32>
    %162 = vector.multi_reduction <add>, %159, %cst_41 [1] : vector<16x32xf32> to vector<16xf32>
    %163 = vector.shape_cast %162 : vector<16xf32> to vector<16x1xf32>
    %cst_42 = arith.constant 3.200000e+01 : f32
    %164 = vector.broadcast %cst_42 : f32 to vector<16x1xf32>
    %165 = arith.divf %163, %164 : vector<16x1xf32>
    %166 = vector.broadcast %165 : vector<16x1xf32> to vector<16x32xf32>
    %167 = arith.subf %159, %166 : vector<16x32xf32>
    %168 = vector.broadcast %165 : vector<16x1xf32> to vector<16x32xf32>
    %169 = arith.subf %159, %168 : vector<16x32xf32>
    %170 = arith.mulf %167, %169 : vector<16x32xf32>
    %cst_43 = arith.constant dense<0.000000e+00> : vector<16xf32>
    %171 = vector.multi_reduction <add>, %170, %cst_43 [1] : vector<16x32xf32> to vector<16xf32>
    %172 = vector.shape_cast %171 : vector<16xf32> to vector<16x1xf32>
    %cst_44 = arith.constant 3.200000e+01 : f32
    %173 = vector.broadcast %cst_44 : f32 to vector<16x1xf32>
    %174 = arith.divf %172, %173 : vector<16x1xf32>
    %175 = vector.broadcast %165 : vector<16x1xf32> to vector<16x32xf32>
    %176 = arith.subf %159, %175 : vector<16x32xf32>
    %cst_45 = arith.constant 9.99999996E-13 : f32
    %177 = vector.broadcast %cst_45 : f32 to vector<16x1xf32>
    %178 = arith.addf %174, %177 : vector<16x1xf32>
    %179 = math.rsqrt %178 : vector<16x1xf32>
    %180 = vector.broadcast %179 : vector<16x1xf32> to vector<16x32xf32>
    %181 = arith.mulf %176, %180 : vector<16x32xf32>
    %182 = vector.broadcast %160 : vector<1x32xf32> to vector<16x32xf32>
    %183 = arith.mulf %181, %182 : vector<16x32xf32>
    %184 = vector.broadcast %161 : vector<1x32xf32> to vector<16x32xf32>
    %185 = arith.addf %183, %184 : vector<16x32xf32>
    %186 = arith.truncf %185 : vector<16x32xf32> to vector<16x32xbf16>
    %c0_46 = arith.constant 0 : index
    %c0_47 = arith.constant 0 : index
    %c0_48 = arith.constant 0 : index
    %187 = vector.load %arg4[%c0_46, %c0_47, %c0_48] : memref<2x32x64xbf16, #tpu.memory_space<vmem>>, vector<1x32x64xbf16>
    %188 = vector.shape_cast %187 : vector<1x32x64xbf16> to vector<32x64xbf16>
    %cst_49 = arith.constant dense<0.000000e+00> : vector<16x64xf32>
    %189 = tpu.matmul %186, %188, %cst_49 {dimension_numbers = #tpu.dot_dimension_numbers<[1], [0], [0], [1], [0, 0, 1, 1], [], []>} : vector<16x32xbf16>, vector<32x64xbf16>, vector<16x64xf32> -> vector<16x64xf32>
    %190 = vector.extract_strided_slice %0 {offsets = [24, 0], sizes = [1, 64], strides = [1, 1]} : vector<40x128xf32> to vector<1x64xf32>
    %191 = vector.broadcast %190 : vector<1x64xf32> to vector<16x64xf32>
    %192 = arith.addf %189, %191 : vector<16x64xf32>
    %cst_50 = arith.constant 5.000000e-01 : f32
    %193 = vector.broadcast %cst_50 : f32 to vector<16x64xf32>
    %194 = arith.mulf %193, %192 : vector<16x64xf32>
    %cst_51 = arith.constant 4.471500e-02 : f32
    %195 = vector.broadcast %cst_51 : f32 to vector<16x64xf32>
    %196 = arith.mulf %195, %192 : vector<16x64xf32>
    %197 = arith.mulf %196, %192 : vector<16x64xf32>
    %198 = arith.mulf %197, %192 : vector<16x64xf32>
    %199 = arith.addf %192, %198 : vector<16x64xf32>
    %cst_52 = arith.constant 0.797884583 : f32
    %200 = vector.broadcast %cst_52 : f32 to vector<16x64xf32>
    %201 = arith.mulf %200, %199 : vector<16x64xf32>
    %202 = math.tanh %201 : vector<16x64xf32>
    %cst_53 = arith.constant 1.000000e+00 : f32
    %203 = vector.broadcast %cst_53 : f32 to vector<16x64xf32>
    %204 = arith.addf %203, %202 : vector<16x64xf32>
    %205 = arith.mulf %194, %204 : vector<16x64xf32>
    %206 = arith.truncf %205 : vector<16x64xf32> to vector<16x64xbf16>
    %c0_54 = arith.constant 0 : index
    %c0_55 = arith.constant 0 : index
    %c0_56 = arith.constant 0 : index
    %207 = vector.load %arg5[%c0_54, %c0_55, %c0_56] : memref<2x64x32xbf16, #tpu.memory_space<vmem>>, vector<1x64x32xbf16>
    %208 = vector.shape_cast %207 : vector<1x64x32xbf16> to vector<64x32xbf16>
    %cst_57 = arith.constant dense<0.000000e+00> : vector<16x32xf32>
    %209 = tpu.matmul %206, %208, %cst_57 {dimension_numbers = #tpu.dot_dimension_numbers<[1], [0], [0], [1], [0, 0, 1, 1], [], []>} : vector<16x64xbf16>, vector<64x32xbf16>, vector<16x32xf32> -> vector<16x32xf32>
    %210 = vector.extract_strided_slice %0 {offsets = [25, 0], sizes = [1, 32], strides = [1, 1]} : vector<40x128xf32> to vector<1x32xf32>
    %211 = vector.broadcast %210 : vector<1x32xf32> to vector<16x32xf32>
    %212 = arith.addf %209, %211 : vector<16x32xf32>
    %213 = arith.addf %212, %185 : vector<16x32xf32>
    %214 = vector.extract_strided_slice %0 {offsets = [26, 0], sizes = [1, 32], strides = [1, 1]} : vector<40x128xf32> to vector<1x32xf32>
    %215 = vector.extract_strided_slice %0 {offsets = [27, 0], sizes = [1, 32], strides = [1, 1]} : vector<40x128xf32> to vector<1x32xf32>
    %cst_58 = arith.constant dense<0.000000e+00> : vector<16xf32>
    %216 = vector.multi_reduction <add>, %213, %cst_58 [1] : vector<16x32xf32> to vector<16xf32>
    %217 = vector.shape_cast %216 : vector<16xf32> to vector<16x1xf32>
    %cst_59 = arith.constant 3.200000e+01 : f32
    %218 = vector.broadcast %cst_59 : f32 to vector<16x1xf32>
    %219 = arith.divf %217, %218 : vector<16x1xf32>
    %220 = vector.broadcast %219 : vector<16x1xf32> to vector<16x32xf32>
    %221 = arith.subf %213, %220 : vector<16x32xf32>
    %222 = vector.broadcast %219 : vector<16x1xf32> to vector<16x32xf32>
    %223 = arith.subf %213, %222 : vector<16x32xf32>
    %224 = arith.mulf %221, %223 : vector<16x32xf32>
    %cst_60 = arith.constant dense<0.000000e+00> : vector<16xf32>
    %225 = vector.multi_reduction <add>, %224, %cst_60 [1] : vector<16x32xf32> to vector<16xf32>
    %226 = vector.shape_cast %225 : vector<16xf32> to vector<16x1xf32>
    %cst_61 = arith.constant 3.200000e+01 : f32
    %227 = vector.broadcast %cst_61 : f32 to vector<16x1xf32>
    %228 = arith.divf %226, %227 : vector<16x1xf32>
    %229 = vector.broadcast %219 : vector<16x1xf32> to vector<16x32xf32>
    %230 = arith.subf %213, %229 : vector<16x32xf32>
    %cst_62 = arith.constant 9.99999996E-13 : f32
    %231 = vector.broadcast %cst_62 : f32 to vector<16x1xf32>
    %232 = arith.addf %228, %231 : vector<16x1xf32>
    %233 = math.rsqrt %232 : vector<16x1xf32>
    %234 = vector.broadcast %233 : vector<16x1xf32> to vector<16x32xf32>
    %235 = arith.mulf %230, %234 : vector<16x32xf32>
    %236 = vector.broadcast %214 : vector<1x32xf32> to vector<16x32xf32>
    %237 = arith.mulf %235, %236 : vector<16x32xf32>
    %238 = vector.broadcast %215 : vector<1x32xf32> to vector<16x32xf32>
    %239 = arith.addf %237, %238 : vector<16x32xf32>
    %240 = arith.truncf %239 : vector<16x32xf32> to vector<16x32xbf16>
    %c1 = arith.constant 1 : index
    %c0_63 = arith.constant 0 : index
    %c0_64 = arith.constant 0 : index
    %241 = vector.load %arg2[%c1, %c0_63, %c0_64] : memref<2x32x96xbf16, #tpu.memory_space<vmem>>, vector<1x32x96xbf16>
    %242 = vector.shape_cast %241 : vector<1x32x96xbf16> to vector<32x96xbf16>
    %cst_65 = arith.constant dense<0.000000e+00> : vector<16x96xf32>
    %243 = tpu.matmul %240, %242, %cst_65 {dimension_numbers = #tpu.dot_dimension_numbers<[1], [0], [0], [1], [0, 0, 1, 1], [], []>} : vector<16x32xbf16>, vector<32x96xbf16>, vector<16x96xf32> -> vector<16x96xf32>
    %244 = vector.extract_strided_slice %0 {offsets = [28, 0], sizes = [1, 96], strides = [1, 1]} : vector<40x128xf32> to vector<1x96xf32>
    %245 = vector.broadcast %244 : vector<1x96xf32> to vector<16x96xf32>
    %246 = arith.addf %243, %245 : vector<16x96xf32>
    %247 = vector.extract_strided_slice %246 {offsets = [0, 0], sizes = [16, 32], strides = [1, 1]} : vector<16x96xf32> to vector<16x32xf32>
    %248 = vector.extract_strided_slice %246 {offsets = [0, 32], sizes = [16, 32], strides = [1, 1]} : vector<16x96xf32> to vector<16x32xf32>
    %249 = vector.extract_strided_slice %246 {offsets = [0, 64], sizes = [16, 32], strides = [1, 1]} : vector<16x96xf32> to vector<16x32xf32>
    %250 = vector.extract_strided_slice %247 {offsets = [0, 0], sizes = [16, 8], strides = [1, 1]} : vector<16x32xf32> to vector<16x8xf32>
    %251 = arith.truncf %250 : vector<16x8xf32> to vector<16x8xbf16>
    %252 = vector.extract_strided_slice %248 {offsets = [0, 0], sizes = [16, 8], strides = [1, 1]} : vector<16x32xf32> to vector<16x8xf32>
    %253 = arith.truncf %252 : vector<16x8xf32> to vector<16x8xbf16>
    %254 = vector.extract_strided_slice %249 {offsets = [0, 0], sizes = [16, 8], strides = [1, 1]} : vector<16x32xf32> to vector<16x8xf32>
    %255 = arith.truncf %254 : vector<16x8xf32> to vector<16x8xbf16>
    %cst_66 = arith.constant dense<0.000000e+00> : vector<16x16xf32>
    %256 = tpu.matmul %251, %253, %cst_66 {dimension_numbers = #tpu.dot_dimension_numbers<[1], [1], [0], [0], [0, 0, 1, 0], [], []>} : vector<16x8xbf16>, vector<16x8xbf16>, vector<16x16xf32> -> vector<16x16xf32>
    %cst_67 = arith.constant 0.353553385 : f32
    %257 = vector.broadcast %cst_67 : f32 to vector<16x16xf32>
    %258 = arith.mulf %256, %257 : vector<16x16xf32>
    %259 = arith.addf %258, %52 : vector<16x16xf32>
    %cst_68 = arith.constant dense<0xFF800000> : vector<16xf32>
    %260 = vector.multi_reduction <maximumf>, %259, %cst_68 [1] : vector<16x16xf32> to vector<16xf32>
    %261 = vector.shape_cast %260 : vector<16xf32> to vector<16x1xf32>
    %262 = vector.broadcast %261 : vector<16x1xf32> to vector<16x16xf32>
    %263 = arith.subf %259, %262 : vector<16x16xf32>
    %264 = math.exp %263 : vector<16x16xf32>
    %cst_69 = arith.constant dense<0.000000e+00> : vector<16xf32>
    %265 = vector.multi_reduction <add>, %264, %cst_69 [1] : vector<16x16xf32> to vector<16xf32>
    %266 = vector.shape_cast %265 : vector<16xf32> to vector<16x1xf32>
    %267 = tpu.reciprocal %266 {approx = true} : vector<16x1xf32> -> vector<16x1xf32>
    %268 = vector.broadcast %267 : vector<16x1xf32> to vector<16x16xf32>
    %269 = arith.mulf %264, %268 : vector<16x16xf32>
    %270 = arith.truncf %269 : vector<16x16xf32> to vector<16x16xbf16>
    %cst_70 = arith.constant dense<0.000000e+00> : vector<16x8xf32>
    %271 = tpu.matmul %270, %255, %cst_70 {dimension_numbers = #tpu.dot_dimension_numbers<[1], [0], [0], [1], [0, 0, 1, 1], [], []>} : vector<16x16xbf16>, vector<16x8xbf16>, vector<16x8xf32> -> vector<16x8xf32>
    %272 = vector.extract_strided_slice %247 {offsets = [0, 8], sizes = [16, 8], strides = [1, 1]} : vector<16x32xf32> to vector<16x8xf32>
    %273 = arith.truncf %272 : vector<16x8xf32> to vector<16x8xbf16>
    %274 = vector.extract_strided_slice %248 {offsets = [0, 8], sizes = [16, 8], strides = [1, 1]} : vector<16x32xf32> to vector<16x8xf32>
    %275 = arith.truncf %274 : vector<16x8xf32> to vector<16x8xbf16>
    %276 = vector.extract_strided_slice %249 {offsets = [0, 8], sizes = [16, 8], strides = [1, 1]} : vector<16x32xf32> to vector<16x8xf32>
    %277 = arith.truncf %276 : vector<16x8xf32> to vector<16x8xbf16>
    %cst_71 = arith.constant dense<0.000000e+00> : vector<16x16xf32>
    %278 = tpu.matmul %273, %275, %cst_71 {dimension_numbers = #tpu.dot_dimension_numbers<[1], [1], [0], [0], [0, 0, 1, 0], [], []>} : vector<16x8xbf16>, vector<16x8xbf16>, vector<16x16xf32> -> vector<16x16xf32>
    %cst_72 = arith.constant 0.353553385 : f32
    %279 = vector.broadcast %cst_72 : f32 to vector<16x16xf32>
    %280 = arith.mulf %278, %279 : vector<16x16xf32>
    %281 = arith.addf %280, %52 : vector<16x16xf32>
    %cst_73 = arith.constant dense<0xFF800000> : vector<16xf32>
    %282 = vector.multi_reduction <maximumf>, %281, %cst_73 [1] : vector<16x16xf32> to vector<16xf32>
    %283 = vector.shape_cast %282 : vector<16xf32> to vector<16x1xf32>
    %284 = vector.broadcast %283 : vector<16x1xf32> to vector<16x16xf32>
    %285 = arith.subf %281, %284 : vector<16x16xf32>
    %286 = math.exp %285 : vector<16x16xf32>
    %cst_74 = arith.constant dense<0.000000e+00> : vector<16xf32>
    %287 = vector.multi_reduction <add>, %286, %cst_74 [1] : vector<16x16xf32> to vector<16xf32>
    %288 = vector.shape_cast %287 : vector<16xf32> to vector<16x1xf32>
    %289 = tpu.reciprocal %288 {approx = true} : vector<16x1xf32> -> vector<16x1xf32>
    %290 = vector.broadcast %289 : vector<16x1xf32> to vector<16x16xf32>
    %291 = arith.mulf %286, %290 : vector<16x16xf32>
    %292 = arith.truncf %291 : vector<16x16xf32> to vector<16x16xbf16>
    %cst_75 = arith.constant dense<0.000000e+00> : vector<16x8xf32>
    %293 = tpu.matmul %292, %277, %cst_75 {dimension_numbers = #tpu.dot_dimension_numbers<[1], [0], [0], [1], [0, 0, 1, 1], [], []>} : vector<16x16xbf16>, vector<16x8xbf16>, vector<16x8xf32> -> vector<16x8xf32>
    %294 = vector.extract_strided_slice %247 {offsets = [0, 16], sizes = [16, 8], strides = [1, 1]} : vector<16x32xf32> to vector<16x8xf32>
    %295 = arith.truncf %294 : vector<16x8xf32> to vector<16x8xbf16>
    %296 = vector.extract_strided_slice %248 {offsets = [0, 16], sizes = [16, 8], strides = [1, 1]} : vector<16x32xf32> to vector<16x8xf32>
    %297 = arith.truncf %296 : vector<16x8xf32> to vector<16x8xbf16>
    %298 = vector.extract_strided_slice %249 {offsets = [0, 16], sizes = [16, 8], strides = [1, 1]} : vector<16x32xf32> to vector<16x8xf32>
    %299 = arith.truncf %298 : vector<16x8xf32> to vector<16x8xbf16>
    %cst_76 = arith.constant dense<0.000000e+00> : vector<16x16xf32>
    %300 = tpu.matmul %295, %297, %cst_76 {dimension_numbers = #tpu.dot_dimension_numbers<[1], [1], [0], [0], [0, 0, 1, 0], [], []>} : vector<16x8xbf16>, vector<16x8xbf16>, vector<16x16xf32> -> vector<16x16xf32>
    %cst_77 = arith.constant 0.353553385 : f32
    %301 = vector.broadcast %cst_77 : f32 to vector<16x16xf32>
    %302 = arith.mulf %300, %301 : vector<16x16xf32>
    %303 = arith.addf %302, %52 : vector<16x16xf32>
    %cst_78 = arith.constant dense<0xFF800000> : vector<16xf32>
    %304 = vector.multi_reduction <maximumf>, %303, %cst_78 [1] : vector<16x16xf32> to vector<16xf32>
    %305 = vector.shape_cast %304 : vector<16xf32> to vector<16x1xf32>
    %306 = vector.broadcast %305 : vector<16x1xf32> to vector<16x16xf32>
    %307 = arith.subf %303, %306 : vector<16x16xf32>
    %308 = math.exp %307 : vector<16x16xf32>
    %cst_79 = arith.constant dense<0.000000e+00> : vector<16xf32>
    %309 = vector.multi_reduction <add>, %308, %cst_79 [1] : vector<16x16xf32> to vector<16xf32>
    %310 = vector.shape_cast %309 : vector<16xf32> to vector<16x1xf32>
    %311 = tpu.reciprocal %310 {approx = true} : vector<16x1xf32> -> vector<16x1xf32>
    %312 = vector.broadcast %311 : vector<16x1xf32> to vector<16x16xf32>
    %313 = arith.mulf %308, %312 : vector<16x16xf32>
    %314 = arith.truncf %313 : vector<16x16xf32> to vector<16x16xbf16>
    %cst_80 = arith.constant dense<0.000000e+00> : vector<16x8xf32>
    %315 = tpu.matmul %314, %299, %cst_80 {dimension_numbers = #tpu.dot_dimension_numbers<[1], [0], [0], [1], [0, 0, 1, 1], [], []>} : vector<16x16xbf16>, vector<16x8xbf16>, vector<16x8xf32> -> vector<16x8xf32>
    %316 = vector.extract_strided_slice %247 {offsets = [0, 24], sizes = [16, 8], strides = [1, 1]} : vector<16x32xf32> to vector<16x8xf32>
    %317 = arith.truncf %316 : vector<16x8xf32> to vector<16x8xbf16>
    %318 = vector.extract_strided_slice %248 {offsets = [0, 24], sizes = [16, 8], strides = [1, 1]} : vector<16x32xf32> to vector<16x8xf32>
    %319 = arith.truncf %318 : vector<16x8xf32> to vector<16x8xbf16>
    %320 = vector.extract_strided_slice %249 {offsets = [0, 24], sizes = [16, 8], strides = [1, 1]} : vector<16x32xf32> to vector<16x8xf32>
    %321 = arith.truncf %320 : vector<16x8xf32> to vector<16x8xbf16>
    %cst_81 = arith.constant dense<0.000000e+00> : vector<16x16xf32>
    %322 = tpu.matmul %317, %319, %cst_81 {dimension_numbers = #tpu.dot_dimension_numbers<[1], [1], [0], [0], [0, 0, 1, 0], [], []>} : vector<16x8xbf16>, vector<16x8xbf16>, vector<16x16xf32> -> vector<16x16xf32>
    %cst_82 = arith.constant 0.353553385 : f32
    %323 = vector.broadcast %cst_82 : f32 to vector<16x16xf32>
    %324 = arith.mulf %322, %323 : vector<16x16xf32>
    %325 = arith.addf %324, %52 : vector<16x16xf32>
    %cst_83 = arith.constant dense<0xFF800000> : vector<16xf32>
    %326 = vector.multi_reduction <maximumf>, %325, %cst_83 [1] : vector<16x16xf32> to vector<16xf32>
    %327 = vector.shape_cast %326 : vector<16xf32> to vector<16x1xf32>
    %328 = vector.broadcast %327 : vector<16x1xf32> to vector<16x16xf32>
    %329 = arith.subf %325, %328 : vector<16x16xf32>
    %330 = math.exp %329 : vector<16x16xf32>
    %cst_84 = arith.constant dense<0.000000e+00> : vector<16xf32>
    %331 = vector.multi_reduction <add>, %330, %cst_84 [1] : vector<16x16xf32> to vector<16xf32>
    %332 = vector.shape_cast %331 : vector<16xf32> to vector<16x1xf32>
    %333 = tpu.reciprocal %332 {approx = true} : vector<16x1xf32> -> vector<16x1xf32>
    %334 = vector.broadcast %333 : vector<16x1xf32> to vector<16x16xf32>
    %335 = arith.mulf %330, %334 : vector<16x16xf32>
    %336 = arith.truncf %335 : vector<16x16xf32> to vector<16x16xbf16>
    %cst_85 = arith.constant dense<0.000000e+00> : vector<16x8xf32>
    %337 = tpu.matmul %336, %321, %cst_85 {dimension_numbers = #tpu.dot_dimension_numbers<[1], [0], [0], [1], [0, 0, 1, 1], [], []>} : vector<16x16xbf16>, vector<16x8xbf16>, vector<16x8xf32> -> vector<16x8xf32>
    %338 = tpu.concatenate %271, %293, %315, %337 in 1 : vector<16x8xf32>, vector<16x8xf32>, vector<16x8xf32>, vector<16x8xf32> -> vector<16x32xf32>
    %339 = arith.truncf %338 : vector<16x32xf32> to vector<16x32xbf16>
    %c1_86 = arith.constant 1 : index
    %c0_87 = arith.constant 0 : index
    %c0_88 = arith.constant 0 : index
    %340 = vector.load %arg3[%c1_86, %c0_87, %c0_88] : memref<2x32x32xbf16, #tpu.memory_space<vmem>>, vector<1x32x32xbf16>
    %341 = vector.shape_cast %340 : vector<1x32x32xbf16> to vector<32x32xbf16>
    %cst_89 = arith.constant dense<0.000000e+00> : vector<16x32xf32>
    %342 = tpu.matmul %339, %341, %cst_89 {dimension_numbers = #tpu.dot_dimension_numbers<[1], [0], [0], [1], [0, 0, 1, 1], [], []>} : vector<16x32xbf16>, vector<32x32xbf16>, vector<16x32xf32> -> vector<16x32xf32>
    %343 = vector.extract_strided_slice %0 {offsets = [29, 0], sizes = [1, 32], strides = [1, 1]} : vector<40x128xf32> to vector<1x32xf32>
    %344 = vector.broadcast %343 : vector<1x32xf32> to vector<16x32xf32>
    %345 = arith.addf %342, %344 : vector<16x32xf32>
    %346 = arith.addf %345, %239 : vector<16x32xf32>
    %347 = vector.extract_strided_slice %0 {offsets = [30, 0], sizes = [1, 32], strides = [1, 1]} : vector<40x128xf32> to vector<1x32xf32>
    %348 = vector.extract_strided_slice %0 {offsets = [31, 0], sizes = [1, 32], strides = [1, 1]} : vector<40x128xf32> to vector<1x32xf32>
    %cst_90 = arith.constant dense<0.000000e+00> : vector<16xf32>
    %349 = vector.multi_reduction <add>, %346, %cst_90 [1] : vector<16x32xf32> to vector<16xf32>
    %350 = vector.shape_cast %349 : vector<16xf32> to vector<16x1xf32>
    %cst_91 = arith.constant 3.200000e+01 : f32
    %351 = vector.broadcast %cst_91 : f32 to vector<16x1xf32>
    %352 = arith.divf %350, %351 : vector<16x1xf32>
    %353 = vector.broadcast %352 : vector<16x1xf32> to vector<16x32xf32>
    %354 = arith.subf %346, %353 : vector<16x32xf32>
    %355 = vector.broadcast %352 : vector<16x1xf32> to vector<16x32xf32>
    %356 = arith.subf %346, %355 : vector<16x32xf32>
    %357 = arith.mulf %354, %356 : vector<16x32xf32>
    %cst_92 = arith.constant dense<0.000000e+00> : vector<16xf32>
    %358 = vector.multi_reduction <add>, %357, %cst_92 [1] : vector<16x32xf32> to vector<16xf32>
    %359 = vector.shape_cast %358 : vector<16xf32> to vector<16x1xf32>
    %cst_93 = arith.constant 3.200000e+01 : f32
    %360 = vector.broadcast %cst_93 : f32 to vector<16x1xf32>
    %361 = arith.divf %359, %360 : vector<16x1xf32>
    %362 = vector.broadcast %352 : vector<16x1xf32> to vector<16x32xf32>
    %363 = arith.subf %346, %362 : vector<16x32xf32>
    %cst_94 = arith.constant 9.99999996E-13 : f32
    %364 = vector.broadcast %cst_94 : f32 to vector<16x1xf32>
    %365 = arith.addf %361, %364 : vector<16x1xf32>
    %366 = math.rsqrt %365 : vector<16x1xf32>
    %367 = vector.broadcast %366 : vector<16x1xf32> to vector<16x32xf32>
    %368 = arith.mulf %363, %367 : vector<16x32xf32>
    %369 = vector.broadcast %347 : vector<1x32xf32> to vector<16x32xf32>
    %370 = arith.mulf %368, %369 : vector<16x32xf32>
    %371 = vector.broadcast %348 : vector<1x32xf32> to vector<16x32xf32>
    %372 = arith.addf %370, %371 : vector<16x32xf32>
    %373 = arith.truncf %372 : vector<16x32xf32> to vector<16x32xbf16>
    %c1_95 = arith.constant 1 : index
    %c0_96 = arith.constant 0 : index
    %c0_97 = arith.constant 0 : index
    %374 = vector.load %arg4[%c1_95, %c0_96, %c0_97] : memref<2x32x64xbf16, #tpu.memory_space<vmem>>, vector<1x32x64xbf16>
    %375 = vector.shape_cast %374 : vector<1x32x64xbf16> to vector<32x64xbf16>
    %cst_98 = arith.constant dense<0.000000e+00> : vector<16x64xf32>
    %376 = tpu.matmul %373, %375, %cst_98 {dimension_numbers = #tpu.dot_dimension_numbers<[1], [0], [0], [1], [0, 0, 1, 1], [], []>} : vector<16x32xbf16>, vector<32x64xbf16>, vector<16x64xf32> -> vector<16x64xf32>
    %377 = vector.extract_strided_slice %0 {offsets = [32, 0], sizes = [1, 64], strides = [1, 1]} : vector<40x128xf32> to vector<1x64xf32>
    %378 = vector.broadcast %377 : vector<1x64xf32> to vector<16x64xf32>
    %379 = arith.addf %376, %378 : vector<16x64xf32>
    %cst_99 = arith.constant 5.000000e-01 : f32
    %380 = vector.broadcast %cst_99 : f32 to vector<16x64xf32>
    %381 = arith.mulf %380, %379 : vector<16x64xf32>
    %cst_100 = arith.constant 4.471500e-02 : f32
    %382 = vector.broadcast %cst_100 : f32 to vector<16x64xf32>
    %383 = arith.mulf %382, %379 : vector<16x64xf32>
    %384 = arith.mulf %383, %379 : vector<16x64xf32>
    %385 = arith.mulf %384, %379 : vector<16x64xf32>
    %386 = arith.addf %379, %385 : vector<16x64xf32>
    %cst_101 = arith.constant 0.797884583 : f32
    %387 = vector.broadcast %cst_101 : f32 to vector<16x64xf32>
    %388 = arith.mulf %387, %386 : vector<16x64xf32>
    %389 = math.tanh %388 : vector<16x64xf32>
    %cst_102 = arith.constant 1.000000e+00 : f32
    %390 = vector.broadcast %cst_102 : f32 to vector<16x64xf32>
    %391 = arith.addf %390, %389 : vector<16x64xf32>
    %392 = arith.mulf %381, %391 : vector<16x64xf32>
    %393 = arith.truncf %392 : vector<16x64xf32> to vector<16x64xbf16>
    %c1_103 = arith.constant 1 : index
    %c0_104 = arith.constant 0 : index
    %c0_105 = arith.constant 0 : index
    %394 = vector.load %arg5[%c1_103, %c0_104, %c0_105] : memref<2x64x32xbf16, #tpu.memory_space<vmem>>, vector<1x64x32xbf16>
    %395 = vector.shape_cast %394 : vector<1x64x32xbf16> to vector<64x32xbf16>
    %cst_106 = arith.constant dense<0.000000e+00> : vector<16x32xf32>
    %396 = tpu.matmul %393, %395, %cst_106 {dimension_numbers = #tpu.dot_dimension_numbers<[1], [0], [0], [1], [0, 0, 1, 1], [], []>} : vector<16x64xbf16>, vector<64x32xbf16>, vector<16x32xf32> -> vector<16x32xf32>
    %397 = vector.extract_strided_slice %0 {offsets = [33, 0], sizes = [1, 32], strides = [1, 1]} : vector<40x128xf32> to vector<1x32xf32>
    %398 = vector.broadcast %397 : vector<1x32xf32> to vector<16x32xf32>
    %399 = arith.addf %396, %398 : vector<16x32xf32>
    %400 = arith.addf %399, %372 : vector<16x32xf32>
    %401 = vector.extract_strided_slice %0 {offsets = [34, 0], sizes = [1, 32], strides = [1, 1]} : vector<40x128xf32> to vector<1x32xf32>
    %402 = vector.extract_strided_slice %0 {offsets = [35, 0], sizes = [1, 32], strides = [1, 1]} : vector<40x128xf32> to vector<1x32xf32>
    %cst_107 = arith.constant dense<0.000000e+00> : vector<16xf32>
    %403 = vector.multi_reduction <add>, %400, %cst_107 [1] : vector<16x32xf32> to vector<16xf32>
    %404 = vector.shape_cast %403 : vector<16xf32> to vector<16x1xf32>
    %cst_108 = arith.constant 3.200000e+01 : f32
    %405 = vector.broadcast %cst_108 : f32 to vector<16x1xf32>
    %406 = arith.divf %404, %405 : vector<16x1xf32>
    %407 = vector.broadcast %406 : vector<16x1xf32> to vector<16x32xf32>
    %408 = arith.subf %400, %407 : vector<16x32xf32>
    %409 = vector.broadcast %406 : vector<16x1xf32> to vector<16x32xf32>
    %410 = arith.subf %400, %409 : vector<16x32xf32>
    %411 = arith.mulf %408, %410 : vector<16x32xf32>
    %cst_109 = arith.constant dense<0.000000e+00> : vector<16xf32>
    %412 = vector.multi_reduction <add>, %411, %cst_109 [1] : vector<16x32xf32> to vector<16xf32>
    %413 = vector.shape_cast %412 : vector<16xf32> to vector<16x1xf32>
    %cst_110 = arith.constant 3.200000e+01 : f32
    %414 = vector.broadcast %cst_110 : f32 to vector<16x1xf32>
    %415 = arith.divf %413, %414 : vector<16x1xf32>
    %416 = vector.broadcast %406 : vector<16x1xf32> to vector<16x32xf32>
    %417 = arith.subf %400, %416 : vector<16x32xf32>
    %cst_111 = arith.constant 9.99999996E-13 : f32
    %418 = vector.broadcast %cst_111 : f32 to vector<16x1xf32>
    %419 = arith.addf %415, %418 : vector<16x1xf32>
    %420 = math.rsqrt %419 : vector<16x1xf32>
    %421 = vector.broadcast %420 : vector<16x1xf32> to vector<16x32xf32>
    %422 = arith.mulf %417, %421 : vector<16x32xf32>
    %423 = vector.broadcast %401 : vector<1x32xf32> to vector<16x32xf32>
    %424 = arith.mulf %422, %423 : vector<16x32xf32>
    %425 = vector.broadcast %402 : vector<1x32xf32> to vector<16x32xf32>
    %426 = arith.addf %424, %425 : vector<16x32xf32>
    %427 = arith.truncf %426 : vector<16x32xf32> to vector<16x32xbf16>
    %c0_112 = arith.constant 0 : index
    %c0_113 = arith.constant 0 : index
    %428 = vector.load %arg6[%c0_112, %c0_113] : memref<32x128xbf16, #tpu.memory_space<vmem>>, vector<32x128xbf16>
    %cst_114 = arith.constant dense<0.000000e+00> : vector<16x128xf32>
    %429 = tpu.matmul %427, %428, %cst_114 {dimension_numbers = #tpu.dot_dimension_numbers<[1], [0], [0], [1], [0, 0, 1, 1], [], []>} : vector<16x32xbf16>, vector<32x128xbf16>, vector<16x128xf32> -> vector<16x128xf32>
    %430 = vector.extract_strided_slice %0 {offsets = [3, 0], sizes = [1, 128], strides = [1, 1]} : vector<40x128xf32> to vector<1x128xf32>
    %431 = vector.broadcast %430 : vector<1x128xf32> to vector<16x128xf32>
    %432 = arith.addf %429, %431 : vector<16x128xf32>
    %cst_115 = arith.constant dense<0xFF800000> : vector<16xf32>
    %433 = vector.multi_reduction <maximumf>, %432, %cst_115 [1] : vector<16x128xf32> to vector<16xf32>
    %434 = vector.shape_cast %433 : vector<16xf32> to vector<16x1xf32>
    %435 = vector.broadcast %434 : vector<16x1xf32> to vector<16x128xf32>
    %436 = arith.subf %432, %435 : vector<16x128xf32>
    %437 = math.exp %436 : vector<16x128xf32>
    %cst_116 = arith.constant dense<0.000000e+00> : vector<16xf32>
    %438 = vector.multi_reduction <add>, %437, %cst_116 [1] : vector<16x128xf32> to vector<16xf32>
    %439 = vector.shape_cast %438 : vector<16xf32> to vector<16x1xf32>
    %440 = vector.broadcast %439 : vector<16x1xf32> to vector<16x128xf32>
    %441 = arith.divf %437, %440 : vector<16x128xf32>
    %c0_117 = arith.constant 0 : index
    %c0_118 = arith.constant 0 : index
    %442 = vector.load %arg8[%c0_117, %c0_118] : memref<16x128xf32, #tpu.memory_space<vmem>>, vector<16x128xf32>
    tpu.vector_store %arg8[%c0_117, %c0_118], %441 {strides = array<i32>} : memref<16x128xf32, #tpu.memory_space<vmem>>, vector<16x128xf32>,
    return
  }
}

</mosaic_0001>

<llo_original>
// kernel: lm_infer.1
$region0: #{lm_infer.1}
  #allocation0 [shape = 'u32[]', space=smem, size = 0x4, offset = 0x4, fixed_abs, tag = 'smem constant byte address 0x4 - core index']
  #allocation1 [shape = 'u32[144,128]{1,0:T(1,128)}', space=vmem, size = 0x12000, scoped, tag = 'internal scratch']
  %s0 = inlined_call_operand.vmem [shape: s32[16,1], index: 0, kind: input, shape index: {}]
  %s1 = inlined_call_operand.vmem [shape: f32[64,32], index: 1, kind: input, shape index: {}]
  %s2 = inlined_call_operand.vmem [shape: bf16[2,32,96], index: 2, kind: input, shape index: {}]
  %s3 = inlined_call_operand.vmem [shape: bf16[2,32,32], index: 3, kind: input, shape index: {}]
  %s4 = inlined_call_operand.vmem [shape: bf16[2,32,64], index: 4, kind: input, shape index: {}]
  %s5 = inlined_call_operand.vmem [shape: bf16[2,64,32], index: 5, kind: input, shape index: {}]
  %s6 = inlined_call_operand.vmem [shape: bf16[32,128], index: 6, kind: input, shape index: {}]
  %s7 = inlined_call_operand.vmem [shape: f32[40,128], index: 7, kind: input, shape index: {}]
  %s8 = inlined_call_operand.hbm [shape: f32[16,128], index: 8, kind: output, shape index: {}]
  %s9 = sld [smem:[#allocation0]]
  $region42: #{lm_infer.1} parent=0
    _
  %s11 = ssub.s32 1, %s9
  %s12 = scalar_select 0, %s11, %s9
  $region1: #{lm_infer.1} parent=0
    #allocation2 [shape = 'u8[8192]{0}', space=vmem, size = 0x2000, scoped, tag = 'output window, operand 0, single buffered']
    #allocation3 [shape = 's32[1]{0}', space=sflag, size = 0x4, scoped, tag = 'scoped memory for lm_infer.1']
    %13 = vsyncpa [#allocation3], 0
    // Predicated region
    $region2: #{lm_infer.1} parent=1 // pred_check
      _
    $region3: #{lm_infer.1} parent=1 // pred_check_branch
      %15 = sbr.rel (0) target = $region5
    $region4: #{lm_infer.1} parent=1 // pred_region
      _
    $region5: #{lm_infer.1} parent=1 // pred_fallthru
      _
    // Predicated region
    $region6: #{lm_infer.1} parent=1 // pred_check
      _
    $region7: #{lm_infer.1} parent=1 // pred_check_branch
      %17 = sbr.rel (0) target = $region9
    $region8: #{lm_infer.1} parent=1 // pred_region
      _
    $region9: #{lm_infer.1} parent=1 // pred_fallthru
      _
    // Predicated region
    $region10: #{lm_infer.1} parent=1 // pred_check
      _
    $region11: #{lm_infer.1} parent=1 // pred_check_branch
      %19 = sbr.rel (0) target = $region13
    $region12: #{lm_infer.1} parent=1 // pred_region
      _
    $region13: #{lm_infer.1} parent=1 // pred_fallthru
      _
    // Predicated region
    $region14: #{lm_infer.1} parent=1 // pred_check
      _
    $region15: #{lm_infer.1} parent=1 // pred_check_branch
      %21 = sbr.rel (0) target = $region17
    $region16: #{lm_infer.1} parent=1 // pred_region
      _
    $region17: #{lm_infer.1} parent=1 // pred_fallthru
      _
    // Predicated region
    $region18: #{lm_infer.1} parent=1 // pred_check
      _
    $region19: #{lm_infer.1} parent=1 // pred_check_branch
      %23 = sbr.rel (0) target = $region21
    $region20: #{lm_infer.1} parent=1 // pred_region
      _
    $region21: #{lm_infer.1} parent=1 // pred_fallthru
      _
    // Predicated region
    $region22: #{lm_infer.1} parent=1 // pred_check
      _
    $region23: #{lm_infer.1} parent=1 // pred_check_branch
      %25 = sbr.rel (0) target = $region25
    $region24: #{lm_infer.1} parent=1 // pred_region
      _
    $region25: #{lm_infer.1} parent=1 // pred_fallthru
      _
    // Predicated region
    $region26: #{lm_infer.1} parent=1 // pred_check
      _
    $region27: #{lm_infer.1} parent=1 // pred_check_branch
      %27 = sbr.rel (0) target = $region29
    $region28: #{lm_infer.1} parent=1 // pred_region
      _
    $region29: #{lm_infer.1} parent=1 // pred_fallthru
      _
    // Predicated region
    $region30: #{lm_infer.1} parent=1 // pred_check
      _
    $region31: #{lm_infer.1} parent=1 // pred_check_branch
      %29 = sbr.rel (0) target = $region33
    $region32: #{lm_infer.1} parent=1 // pred_region
      _
    $region33: #{lm_infer.1} parent=1 // pred_fallthru
      _
    %v31 = vld [vmem:[%s7] sm:$0xff]
    %v32 = vld [vmem:[%s7 + $0x8] sm:$0xff]
    %v33 = vld [vmem:[%s7 + $0x10] sm:$0xff]
    %v34 = vld [vmem:[%s7 + $0x18] sm:$0xff]
    %v35 = vld [vmem:[%s7 + $0x20] sm:$0xff]
    %v36 = vld [vmem:[%s0] sm:$0xff]
    %v37 = vld [vmem:[%s0 + $0x8] sm:$0xff]
    %v38 = vlaneseq
    %v39 = vand.u32 %v38, 127
    %40 = vset.pattern.permute.xlu0 0
    %41 = vperm.xlu0 %40, %v36
    %v42 = vpop.permute.xlu0 %41
    %43 = vset.pattern.permute.xlu0 0
    %44 = vperm.xlu0 %43, %v37
    %v45 = vpop.permute.xlu0 %44
    %vm46 = vcmp.eq.s32.totalorder %v39, %v42
    %vm47 = vcmp.eq.s32.totalorder %v39, %v45
    %v48 = vsel %vm46, 1, 0
    %v49 = vsel %vm47, 1, 0
    %v50 = vcvt.s32.f32 %v48
    %v51 = vcvt.s32.f32 %v49
    %v52 = vld [vmem:[%s1] sm:$0xff]
    %v53 = vld [vmem:[%s1 + $0x8] sm:$0xff]
    %v54 = vld [vmem:[%s1 + $0x10] sm:$0xff]
    %v55 = vld [vmem:[%s1 + $0x18] sm:$0xff]
    %v56 = vld [vmem:[%s1 + $0x20] sm:$0xff]
    %v57 = vld [vmem:[%s1 + $0x28] sm:$0xff]
    %v58 = vld [vmem:[%s1 + $0x30] sm:$0xff]
    %v59 = vld [vmem:[%s1 + $0x38] sm:$0xff]
    %vm62 = vcmask 1043456
    %v63 = vrot.slane %v31, 4
    %v64 = vrot.slane %v32, 4
    %v65 = vsel %vm62, %v63, %v64
    %vm67 = vcmask 523264
    %v69 = vsel %vm67, %v50, 0
    %v72 = vsel %vm67, %v51, 0
    %74 = vmatprep.subr.mxu0 0.0
    %75 = vmatpush1.msra.mxu0 %v52
    %76 = vmatprep.subr.mxu0 0.0
    %77 = vmatpush1.msra.mxu0 %v53
    %78 = vmatprep.subr.mxu0 0.0
    %79 = vmatpush1.msra.mxu0 %v54
    %80 = vmatprep.subr.mxu0 0.0
    %81 = vmatpush1.msra.mxu0 %v55
    %82 = vmatprep.subr.mxu0 0.0
    %83 = vmatpush1.msra.mxu0 %v56
    %84 = vmatprep.subr.mxu0 0.0
    %85 = vmatpush1.msra.mxu0 %v57
    %86 = vmatprep.subr.mxu0 0.0
    %87 = vmatpush1.msra.mxu0 %v58
    %88 = vmatprep.subr.mxu0 0.0
    %89 = vmatpush1.msra.mxu0 %v59
    %90 = vmatprep.subr.mxu0 0.0
    %91 = vmatpush1.msra.mxu0 0.0
    %92 = vmatprep.subr.mxu0 0.0
    %93 = vmatpush1.msra.mxu0 0.0
    %94 = vmatprep.subr.mxu0 0.0
    %95 = vmatpush1.msra.mxu0 0.0
    %96 = vmatprep.subr.mxu0 0.0
    %97 = vmatpush1.msra.mxu0 0.0
    %98 = vmatprep.subr.mxu0 0.0
    %99 = vmatpush1.msra.mxu0 0.0
    %100 = vmatprep.subr.mxu0 0.0
    %101 = vmatpush1.msra.mxu0 0.0
    %102 = vmatprep.subr.mxu0 0.0
    %103 = vmatpush1.msra.mxu0 0.0
    %104 = vmatprep.subr.mxu0 0.0
    %105 = vmatpush1.msra.mxu0 0.0
    %106 = vmatprep.subr.mxu0 0.0
    %107 = vmatpush1.msra.mxu0 0.0
    %108 = vmatprep.subr.mxu0 0.0
    %109 = vmatpush1.msra.mxu0 0.0
    %110 = vmatprep.subr.mxu0 0.0
    %111 = vmatpush1.msra.mxu0 0.0
    %112 = vmatprep.subr.mxu0 0.0
    %113 = vmatpush1.msra.mxu0 0.0
    %114 = vmatprep.subr.mxu0 0.0
    %115 = vmatpush1.msra.mxu0 0.0
    %116 = vmatprep.subr.mxu0 0.0
    %117 = vmatpush1.msra.mxu0 0.0
    %118 = vmatprep.subr.mxu0 0.0
    %119 = vmatpush1.msra.mxu0 0.0
    %120 = vmatprep.subr.mxu0 0.0
    %121 = vmatpush1.msra.mxu0 0.0
    %122 = vmatprep.subr.mxu0 0.0
    %123 = vmatpush1.msra.mxu0 0.0
    %124 = vmatprep.subr.mxu0 0.0
    %125 = vmatpush1.msra.mxu0 0.0
    %126 = vmatprep.subr.mxu0 0.0
    %127 = vmatpush1.msra.mxu0 0.0
    %128 = vmatprep.subr.mxu0 0.0
    %129 = vmatpush1.msra.mxu0 0.0
    %130 = vmatprep.subr.mxu0 0.0
    %131 = vmatpush1.msra.mxu0 0.0
    %132 = vmatprep.subr.mxu0 0.0
    %133 = vmatpush1.msra.mxu0 0.0
    %134 = vmatprep.subr.mxu0 0.0
    %135 = vmatpush1.msra.mxu0 0.0
    %136 = vmatprep.subr.mxu0 0.0
    %137 = vmatpush1.msra.mxu0 0.0
    %138 = vmatprep.mubr.f32.mxu0 0.0
    %139 = vmatmul.mubr.f32.gmra.mrb[0].mxu0 %v69
    %v140 = vpop.f32.mrb[0].mxu0
    %v141 = vadd.f32 %v65, %v140
    %v142 = vpop.f32.mrb[0].mxu0
    %143 = vmatprep.mubr.f32.mxu0 0.0
    %144 = vmatmul.mubr.f32.gmra.mrb[0].mxu0 %v72
    %v145 = vpop.f32.mrb[0].mxu0
    %v146 = vadd.f32 %v65, %v145
    %v147 = vpop.f32.mrb[0].mxu0
    %148 = vdwg.mxu0
    %v149 = vlaneseq
    %v150 = vshrl.u32 %v149, 7
    %v151 = vsub.s32 2, %v150
    %v152 = vrot.slane %v31, %v151
    %v153 = vadd.f32 %v141, %v152
    %v154 = vadd.f32 %v146, %v152
    %vm155 = vcmask 261120
    %v156 = vsel %vm155, %v153, 0.0
    %157 = vadd.xlane.f32.xlu0 %v156
    %v158 = vpop.xlane.xlu0 %157
    %v159 = vsel %vm155, %v154, 0.0
    %160 = vadd.xlane.f32.xlu0 %v159
    %v161 = vpop.xlane.xlu0 %160
    %v162 = vrcp.pop 32.0
    %v163 = vmul.f32 %v158, %v162
    %v164 = vmul.f32 %v161, %v162
    %v165 = vsub.f32 %v153, %v163
    %v166 = vsub.f32 %v154, %v164
    %v167 = vmul.f32 %v165, %v165
    %v168 = vmul.f32 %v166, %v166
    %v169 = vsel %vm155, %v167, 0.0
    %170 = vadd.xlane.f32.xlu0 %v169
    %v171 = vpop.xlane.xlu0 %170
    %v172 = vsel %vm155, %v168, 0.0
    %173 = vadd.xlane.f32.xlu0 %v172
    %v174 = vpop.xlane.xlu0 %173
    %v175 = vmul.f32 %v171, %v162
    %v176 = vmul.f32 %v174, %v162
    %v177 = vadd.f32 %v175, 1e-12
    %v178 = vadd.f32 %v176, 1e-12
    %v179 = vrsqrt.pop %v177
    %v180 = vrsqrt.pop %v178
    %v181 = vmul.f32 %v165, %v179
    %v182 = vmul.f32 %v166, %v180
    %v183 = vlaneseq
    %v184 = vshrl.u32 %v183, 7
    %v185 = vsub.s32 0, %v184
    %v186 = vrot.slane %v31, %v185
    %v187 = vmul.f32 %v181, %v186
    %v188 = vmul.f32 %v182, %v186
    %v189 = vlaneseq
    %v190 = vshrl.u32 %v189, 7
    %v191 = vsub.s32 1, %v190
    %v192 = vrot.slane %v31, %v191
    %v193 = vadd.f32 %v187, %v192
    %v194 = vadd.f32 %v188, %v192
    %v195 = vlaneseq
    %v196 = vshrl.u32 %v195, 7
    %v197 = vadd.s32 %v196, 8
    %v198 = vand.u32 %v196, 4294967288
    %v199 = vand.u32 %v197, 4294967288
    %v200 = vand.u32 %v39, 4294967288
    %vm201 = vcmp.eq.s32.totalorder %v198, %v200
    %vm202 = vcmp.eq.s32.totalorder %v199, %v200
    %vm203 = vcmp.le.s32.totalorder %v39, %v196
    %vm204 = vcmp.le.s32.totalorder %v39, %v197
    %vm205 = vmand %vm203, %vm201
    %vm206 = vmand %vm204, %vm202
    %v207 = vsel %vm205, 0.0, -10000.0
    %v208 = vsel %vm206, 0.0, -10000.0
    %v209 = vpack.c.bf16 %v194, %v193
    %v210 = vld [vmem:[%s2] sm:$0xf]
    %v211 = vld [vmem:[%s2 + $0x4] sm:$0xf]
    %v212 = vld [vmem:[%s2 + $0x8] sm:$0xf]
    %v213 = vld [vmem:[%s2 + $0xc] sm:$0xf]
    %v214 = vlaneseq
    %v215 = vshrl.u32 %v214, 7
    %v216 = vsub.s32 4, %v215
    %v217 = vrot.slane %v33, %v216
    %v222 = vunpack.c.l.b16 %v210
    %v223 = vunpack.c.l.b16 %v211
    %v224 = vunpack.c.l.b16 %v212
    %v225 = vunpack.c.l.b16 %v213
    %v226 = vpack.c.b16 %v223, %v222
    %v227 = vpack.c.b16 %v225, %v224
    %v231 = vsel %vm155, %v209, 0
    %233 = vmatprep.subr.bf16.mxu0 0
    %234 = vmatpush1.bf16.msra.mxu0 %v226
    %235 = vmatprep.subr.bf16.mxu0 0
    %236 = vmatpush1.bf16.msra.mxu0 %v227
    %237 = vmatprep.subr.bf16.mxu0 0
    %238 = vmatpush1.bf16.msra.mxu0 0
    %239 = vmatprep.subr.bf16.mxu0 0
    %240 = vmatpush1.bf16.msra.mxu0 0
    %241 = vmatprep.subr.bf16.mxu0 0
    %242 = vmatpush1.bf16.msra.mxu0 0
    %243 = vmatprep.subr.bf16.mxu0 0
    %244 = vmatpush1.bf16.msra.mxu0 0
    %245 = vmatprep.subr.bf16.mxu0 0
    %246 = vmatpush1.bf16.msra.mxu0 0
    %247 = vmatprep.subr.bf16.mxu0 0
    %248 = vmatpush1.bf16.msra.mxu0 0
    %249 = vmatprep.subr.bf16.mxu0 0
    %250 = vmatpush1.bf16.msra.mxu0 0
    %251 = vmatprep.subr.bf16.mxu0 0
    %252 = vmatpush1.bf16.msra.mxu0 0
    %253 = vmatprep.subr.bf16.mxu0 0
    %254 = vmatpush1.bf16.msra.mxu0 0
    %255 = vmatprep.subr.bf16.mxu0 0
    %256 = vmatpush1.bf16.msra.mxu0 0
    %257 = vmatprep.subr.bf16.mxu0 0
    %258 = vmatpush1.bf16.msra.mxu0 0
    %259 = vmatprep.subr.bf16.mxu0 0
    %260 = vmatpush1.bf16.msra.mxu0 0
    %261 = vmatprep.subr.bf16.mxu0 0
    %262 = vmatpush1.bf16.msra.mxu0 0
    %263 = vmatprep.subr.bf16.mxu0 0
    %264 = vmatpush1.bf16.msra.mxu0 0
    %265 = vmatprep.mubr.bf16.mxu0 0
    %266 = vmatmul.mubr.bf16.gmra.mrb[0].mxu0 %v231
    %v267 = vpop.f32.mrb[0].mxu0
    %v268 = vadd.f32 %v217, %v267
    %v269 = vpop.f32.mrb[0].mxu0
    %v270 = vpop.f32.mrb[0].mxu0
    %v271 = vadd.f32 %v217, %v270
    %v272 = vpop.f32.mrb[0].mxu0
    %273 = vdwg.mxu0
    %v274 = vpack.c.bf16 %v271, %v268
    %276 = vrot.lane.b32.xlu0 %v274, 96
    %v277 = vpop.permute.xlu0 %276
    %vm278 = vcmask 64512
    %v280 = vsel %vm278, %v274, 0
    %v283 = vsel %vm278, %v277, 0
    %285 = vmatprep.subr.bf16.mxu0 0
    %286 = vmatpush1.bf16.xpose.msra.mxu0 %v283
    %287 = vmatprep.subr.bf16.mxu0 0
    %288 = vmatpush1.bf16.xpose.msra.mxu0 0
    %289 = vmatprep.subr.bf16.mxu0 0
    %290 = vmatpush1.bf16.xpose.msra.mxu0 0
    %291 = vmatprep.subr.bf16.mxu0 0
    %292 = vmatpush1.bf16.xpose.msra.mxu0 0
    %293 = vmatprep.subr.bf16.mxu0 0
    %294 = vmatpush1.bf16.xpose.msra.mxu0 0
    %295 = vmatprep.subr.bf16.mxu0 0
    %296 = vmatpush1.bf16.xpose.msra.mxu0 0
    %297 = vmatprep.subr.bf16.mxu0 0
    %298 = vmatpush1.bf16.xpose.msra.mxu0 0
    %299 = vmatprep.subr.bf16.mxu0 0
    %300 = vmatpush1.bf16.xpose.msra.mxu0 0
    %301 = vmatprep.subr.bf16.mxu0 0
    %302 = vmatpush1.bf16.xpose.msra.mxu0 0
    %303 = vmatprep.subr.bf16.mxu0 0
    %304 = vmatpush1.bf16.xpose.msra.mxu0 0
    %305 = vmatprep.subr.bf16.mxu0 0
    %306 = vmatpush1.bf16.xpose.msra.mxu0 0
    %307 = vmatprep.subr.bf16.mxu0 0
    %308 = vmatpush1.bf16.xpose.msra.mxu0 0
    %309 = vmatprep.subr.bf16.mxu0 0
    %310 = vmatpush1.bf16.xpose.msra.mxu0 0
    %311 = vmatprep.subr.bf16.mxu0 0
    %312 = vmatpush1.bf16.xpose.msra.mxu0 0
    %313 = vmatprep.subr.bf16.mxu0 0
    %314 = vmatpush1.bf16.xpose.msra.mxu0 0
    %315 = vmatprep.subr.bf16.mxu0 0
    %316 = vmatpush1.bf16.xpose.msra.mxu0 0
    %317 = vmatprep.mubr.bf16.mxu0 0
    %318 = vmatmul.mubr.bf16.gmra.mrb[0].mxu0 %v280
    %v319 = vpop.f32.mrb[0].mxu0
    %v320 = vadd.f32 0.0, %v319
    %v321 = vpop.f32.mrb[0].mxu0
    %v322 = vpop.f32.mrb[0].mxu0
    %v323 = vadd.f32 0.0, %v322
    %v324 = vpop.f32.mrb[0].mxu0
    %325 = vdwg.mxu0
    %v326 = vmul.f32 %v320, 0.35355338
    %v327 = vmul.f32 %v323, 0.35355338
    %v328 = vadd.f32 %v326, %v207
    %v329 = vadd.f32 %v327, %v208
    %vm330 = vcmask 130048
    %v331 = vsel %vm330, %v328, -inf
    %332 = vmax.xlane.f32.xlu0 %v331
    %v333 = vpop.xlane.xlu0 %332
    %v334 = vsel %vm330, %v329, -inf
    %335 = vmax.xlane.f32.xlu0 %v334
    %v336 = vpop.xlane.xlu0 %335
    %v337 = vsub.f32 %v328, %v333
    %v338 = vsub.f32 %v329, %v336
    %v339 = vmul.f32 %v337, 1.442695
    %v340 = vpow.pop %v339
    %v341 = vmul.f32 %v338, 1.442695
    %v342 = vpow.pop %v341
    %v343 = vsel %vm330, %v340, 0.0
    %344 = vadd.xlane.f32.xlu0 %v343
    %v345 = vpop.xlane.xlu0 %344
    %v346 = vsel %vm330, %v342, 0.0
    %347 = vadd.xlane.f32.xlu0 %v346
    %v348 = vpop.xlane.xlu0 %347
    %v349 = vrcp.pop %v345
    %v350 = vrcp.pop %v348
    %v351 = vmul.f32 %v340, %v349
    %v352 = vmul.f32 %v342, %v350
    %v353 = vpack.c.bf16 %v352, %v351
    %354 = vrot.lane.b32.xlu0 %v274, 64
    %v355 = vpop.permute.xlu0 %354
    %v358 = vsel %vm330, %v353, 0
    %360 = vmatprep.subr.bf16.mxu0 0
    %361 = vmatpush1.bf16.msra.mxu0 %v355
    %362 = vmatprep.subr.bf16.mxu0 0
    %363 = vmatpush1.bf16.msra.mxu0 0
    %364 = vmatprep.subr.bf16.mxu0 0
    %365 = vmatpush1.bf16.msra.mxu0 0
    %366 = vmatprep.subr.bf16.mxu0 0
    %367 = vmatpush1.bf16.msra.mxu0 0
    %368 = vmatprep.subr.bf16.mxu0 0
    %369 = vmatpush1.bf16.msra.mxu0 0
    %370 = vmatprep.subr.bf16.mxu0 0
    %371 = vmatpush1.bf16.msra.mxu0 0
    %372 = vmatprep.subr.bf16.mxu0 0
    %373 = vmatpush1.bf16.msra.mxu0 0
    %374 = vmatprep.subr.bf16.mxu0 0
    %375 = vmatpush1.bf16.msra.mxu0 0
    %376 = vmatprep.subr.bf16.mxu0 0
    %377 = vmatpush1.bf16.msra.mxu0 0
    %378 = vmatprep.subr.bf16.mxu0 0
    %379 = vmatpush1.bf16.msra.mxu0 0
    %380 = vmatprep.subr.bf16.mxu0 0
    %381 = vmatpush1.bf16.msra.mxu0 0
    %382 = vmatprep.subr.bf16.mxu0 0
    %383 = vmatpush1.bf16.msra.mxu0 0
    %384 = vmatprep.subr.bf16.mxu0 0
    %385 = vmatpush1.bf16.msra.mxu0 0
    %386 = vmatprep.subr.bf16.mxu0 0
    %387 = vmatpush1.bf16.msra.mxu0 0
    %388 = vmatprep.subr.bf16.mxu0 0
    %389 = vmatpush1.bf16.msra.mxu0 0
    %390 = vmatprep.subr.bf16.mxu0 0
    %391 = vmatpush1.bf16.msra.mxu0 0
    %392 = vmatprep.mubr.bf16.mxu0 0
    %393 = vmatmul.mubr.bf16.gmra.mrb[0].mxu0 %v358
    %v394 = vpop.f32.mrb[0].mxu0
    %v395 = vadd.f32 0.0, %v394
    %v396 = vpop.f32.mrb[0].mxu0
    %v397 = vpop.f32.mrb[0].mxu0
    %v398 = vadd.f32 0.0, %v397
    %v399 = vpop.f32.mrb[0].mxu0
    %400 = vdwg.mxu0
    %401 = vrot.lane.b32.xlu0 %v274, 120
    %v402 = vpop.permute.xlu0 %401
    %403 = vrot.lane.b32.xlu0 %v274, 88
    %v404 = vpop.permute.xlu0 %403
    %v406 = vsel %vm278, %v402, 0
    %v409 = vsel %vm278, %v404, 0
    %411 = vmatprep.subr.bf16.mxu0 0
    %412 = vmatpush1.bf16.xpose.msra.mxu0 %v409
    %413 = vmatprep.subr.bf16.mxu0 0
    %414 = vmatpush1.bf16.xpose.msra.mxu0 0
    %415 = vmatprep.subr.bf16.mxu0 0
    %416 = vmatpush1.bf16.xpose.msra.mxu0 0
    %417 = vmatprep.subr.bf16.mxu0 0
    %418 = vmatpush1.bf16.xpose.msra.mxu0 0
    %419 = vmatprep.subr.bf16.mxu0 0
    %420 = vmatpush1.bf16.xpose.msra.mxu0 0
    %421 = vmatprep.subr.bf16.mxu0 0
    %422 = vmatpush1.bf16.xpose.msra.mxu0 0
    %423 = vmatprep.subr.bf16.mxu0 0
    %424 = vmatpush1.bf16.xpose.msra.mxu0 0
    %425 = vmatprep.subr.bf16.mxu0 0
    %426 = vmatpush1.bf16.xpose.msra.mxu0 0
    %427 = vmatprep.subr.bf16.mxu0 0
    %428 = vmatpush1.bf16.xpose.msra.mxu0 0
    %429 = vmatprep.subr.bf16.mxu0 0
    %430 = vmatpush1.bf16.xpose.msra.mxu0 0
    %431 = vmatprep.subr.bf16.mxu0 0
    %432 = vmatpush1.bf16.xpose.msra.mxu0 0
    %433 = vmatprep.subr.bf16.mxu0 0
    %434 = vmatpush1.bf16.xpose.msra.mxu0 0
    %435 = vmatprep.subr.bf16.mxu0 0
    %436 = vmatpush1.bf16.xpose.msra.mxu0 0
    %437 = vmatprep.subr.bf16.mxu0 0
    %438 = vmatpush1.bf16.xpose.msra.mxu0 0
    %439 = vmatprep.subr.bf16.mxu0 0
    %440 = vmatpush1.bf16.xpose.msra.mxu0 0
    %441 = vmatprep.subr.bf16.mxu0 0
    %442 = vmatpush1.bf16.xpose.msra.mxu0 0
    %443 = vmatprep.mubr.bf16.mxu0 0
    %444 = vmatmul.mubr.bf16.gmra.mrb[0].mxu0 %v406
    %v445 = vpop.f32.mrb[0].mxu0
    %v446 = vadd.f32 0.0, %v445
    %v447 = vpop.f32.mrb[0].mxu0
    %v448 = vpop.f32.mrb[0].mxu0
    %v449 = vadd.f32 0.0, %v448
    %v450 = vpop.f32.mrb[0].mxu0
    %451 = vdwg.mxu0
    %v452 = vmul.f32 %v446, 0.35355338
    %v453 = vmul.f32 %v449, 0.35355338
    %v454 = vadd.f32 %v452, %v207
    %v455 = vadd.f32 %v453, %v208
    %v456 = vsel %vm330, %v454, -inf
    %457 = vmax.xlane.f32.xlu0 %v456
    %v458 = vpop.xlane.xlu0 %457
    %v459 = vsel %vm330, %v455, -inf
    %460 = vmax.xlane.f32.xlu0 %v459
    %v461 = vpop.xlane.xlu0 %460
    %v462 = vsub.f32 %v454, %v458
    %v463 = vsub.f32 %v455, %v461
    %v464 = vmul.f32 %v462, 1.442695
    %v465 = vpow.pop %v464
    %v466 = vmul.f32 %v463, 1.442695
    %v467 = vpow.pop %v466
    %v468 = vsel %vm330, %v465, 0.0
    %469 = vadd.xlane.f32.xlu0 %v468
    %v470 = vpop.xlane.xlu0 %469
    %v471 = vsel %vm330, %v467, 0.0
    %472 = vadd.xlane.f32.xlu0 %v471
    %v473 = vpop.xlane.xlu0 %472
    %v474 = vrcp.pop %v470
    %v475 = vrcp.pop %v473
    %v476 = vmul.f32 %v465, %v474
    %v477 = vmul.f32 %v467, %v475
    %v478 = vpack.c.bf16 %v477, %v476
    %479 = vrot.lane.b32.xlu0 %v274, 56
    %v480 = vpop.permute.xlu0 %479
    %v483 = vsel %vm330, %v478, 0
    %485 = vmatprep.subr.bf16.mxu0 0
    %486 = vmatpush1.bf16.msra.mxu0 %v480
    %487 = vmatprep.subr.bf16.mxu0 0
    %488 = vmatpush1.bf16.msra.mxu0 0
    %489 = vmatprep.subr.bf16.mxu0 0
    %490 = vmatpush1.bf16.msra.mxu0 0
    %491 = vmatprep.subr.bf16.mxu0 0
    %492 = vmatpush1.bf16.msra.mxu0 0
    %493 = vmatprep.subr.bf16.mxu0 0
    %494 = vmatpush1.bf16.msra.mxu0 0
    %495 = vmatprep.subr.bf16.mxu0 0
    %496 = vmatpush1.bf16.msra.mxu0 0
    %497 = vmatprep.subr.bf16.mxu0 0
    %498 = vmatpush1.bf16.msra.mxu0 0
    %499 = vmatprep.subr.bf16.mxu0 0
    %500 = vmatpush1.bf16.msra.mxu0 0
    %501 = vmatprep.subr.bf16.mxu0 0
    %502 = vmatpush1.bf16.msra.mxu0 0
    %503 = vmatprep.subr.bf16.mxu0 0
    %504 = vmatpush1.bf16.msra.mxu0 0
    %505 = vmatprep.subr.bf16.mxu0 0
    %506 = vmatpush1.bf16.msra.mxu0 0
    %507 = vmatprep.subr.bf16.mxu0 0
    %508 = vmatpush1.bf16.msra.mxu0 0
    %509 = vmatprep.subr.bf16.mxu0 0
    %510 = vmatpush1.bf16.msra.mxu0 0
    %511 = vmatprep.subr.bf16.mxu0 0
    %512 = vmatpush1.bf16.msra.mxu0 0
    %513 = vmatprep.subr.bf16.mxu0 0
    %514 = vmatpush1.bf16.msra.mxu0 0
    %515 = vmatprep.subr.bf16.mxu0 0
    %516 = vmatpush1.bf16.msra.mxu0 0
    %517 = vmatprep.mubr.bf16.mxu0 0
    %518 = vmatmul.mubr.bf16.gmra.mrb[0].mxu0 %v483
    %v519 = vpop.f32.mrb[0].mxu0
    %v520 = vadd.f32 0.0, %v519
    %v521 = vpop.f32.mrb[0].mxu0
    %v522 = vpop.f32.mrb[0].mxu0
    %v523 = vadd.f32 0.0, %v522
    %v524 = vpop.f32.mrb[0].mxu0
    %525 = vdwg.mxu0
    %526 = vrot.lane.b32.xlu0 %v274, 112
    %v527 = vpop.permute.xlu0 %526
    %528 = vrot.lane.b32.xlu0 %v274, 80
    %v529 = vpop.permute.xlu0 %528
    %v531 = vsel %vm278, %v527, 0
    %v534 = vsel %vm278, %v529, 0
    %536 = vmatprep.subr.bf16.mxu0 0
    %537 = vmatpush1.bf16.xpose.msra.mxu0 %v534
    %538 = vmatprep.subr.bf16.mxu0 0
    %539 = vmatpush1.bf16.xpose.msra.mxu0 0
    %540 = vmatprep.subr.bf16.mxu0 0
    %541 = vmatpush1.bf16.xpose.msra.mxu0 0
    %542 = vmatprep.subr.bf16.mxu0 0
    %543 = vmatpush1.bf16.xpose.msra.mxu0 0
    %544 = vmatprep.subr.bf16.mxu0 0
    %545 = vmatpush1.bf16.xpose.msra.mxu0 0
    %546 = vmatprep.subr.bf16.mxu0 0
    %547 = vmatpush1.bf16.xpose.msra.mxu0 0
    %548 = vmatprep.subr.bf16.mxu0 0
    %549 = vmatpush1.bf16.xpose.msra.mxu0 0
    %550 = vmatprep.subr.bf16.mxu0 0
    %551 = vmatpush1.bf16.xpose.msra.mxu0 0
    %552 = vmatprep.subr.bf16.mxu0 0
    %553 = vmatpush1.bf16.xpose.msra.mxu0 0
    %554 = vmatprep.subr.bf16.mxu0 0
    %555 = vmatpush1.bf16.xpose.msra.mxu0 0
    %556 = vmatprep.subr.bf16.mxu0 0
    %557 = vmatpush1.bf16.xpose.msra.mxu0 0
    %558 = vmatprep.subr.bf16.mxu0 0
    %559 = vmatpush1.bf16.xpose.msra.mxu0 0
    %560 = vmatprep.subr.bf16.mxu0 0
    %561 = vmatpush1.bf16.xpose.msra.mxu0 0
    %562 = vmatprep.subr.bf16.mxu0 0
    %563 = vmatpush1.bf16.xpose.msra.mxu0 0
    %564 = vmatprep.subr.bf16.mxu0 0
    %565 = vmatpush1.bf16.xpose.msra.mxu0 0
    %566 = vmatprep.subr.bf16.mxu0 0
    %567 = vmatpush1.bf16.xpose.msra.mxu0 0
    %568 = vmatprep.mubr.bf16.mxu0 0
    %569 = vmatmul.mubr.bf16.gmra.mrb[0].mxu0 %v531
    %v570 = vpop.f32.mrb[0].mxu0
    %v571 = vadd.f32 0.0, %v570
    %v572 = vpop.f32.mrb[0].mxu0
    %v573 = vpop.f32.mrb[0].mxu0
    %v574 = vadd.f32 0.0, %v573
    %v575 = vpop.f32.mrb[0].mxu0
    %576 = vdwg.mxu0
    %v577 = vmul.f32 %v571, 0.35355338
    %v578 = vmul.f32 %v574, 0.35355338
    %v579 = vadd.f32 %v577, %v207
    %v580 = vadd.f32 %v578, %v208
    %v581 = vsel %vm330, %v579, -inf
    %582 = vmax.xlane.f32.xlu0 %v581
    %v583 = vpop.xlane.xlu0 %582
    %v584 = vsel %vm330, %v580, -inf
    %585 = vmax.xlane.f32.xlu0 %v584
    %v586 = vpop.xlane.xlu0 %585
    %v587 = vsub.f32 %v579, %v583
    %v588 = vsub.f32 %v580, %v586
    %v589 = vmul.f32 %v587, 1.442695
    %v590 = vpow.pop %v589
    %v591 = vmul.f32 %v588, 1.442695
    %v592 = vpow.pop %v591
    %v593 = vsel %vm330, %v590, 0.0
    %594 = vadd.xlane.f32.xlu0 %v593
    %v595 = vpop.xlane.xlu0 %594
    %v596 = vsel %vm330, %v592, 0.0
    %597 = vadd.xlane.f32.xlu0 %v596
    %v598 = vpop.xlane.xlu0 %597
    %v599 = vrcp.pop %v595
    %v600 = vrcp.pop %v598
    %v601 = vmul.f32 %v590, %v599
    %v602 = vmul.f32 %v592, %v600
    %v603 = vpack.c.bf16 %v602, %v601
    %604 = vrot.lane.b32.xlu0 %v274, 48
    %v605 = vpop.permute.xlu0 %604
    %v608 = vsel %vm330, %v603, 0
    %610 = vmatprep.subr.bf16.mxu0 0
    %611 = vmatpush1.bf16.msra.mxu0 %v605
    %612 = vmatprep.subr.bf16.mxu0 0
    %613 = vmatpush1.bf16.msra.mxu0 0
    %614 = vmatprep.subr.bf16.mxu0 0
    %615 = vmatpush1.bf16.msra.mxu0 0
    %616 = vmatprep.subr.bf16.mxu0 0
    %617 = vmatpush1.bf16.msra.mxu0 0
    %618 = vmatprep.subr.bf16.mxu0 0
    %619 = vmatpush1.bf16.msra.mxu0 0
    %620 = vmatprep.subr.bf16.mxu0 0
    %621 = vmatpush1.bf16.msra.mxu0 0
    %622 = vmatprep.subr.bf16.mxu0 0
    %623 = vmatpush1.bf16.msra.mxu0 0
    %624 = vmatprep.subr.bf16.mxu0 0
    %625 = vmatpush1.bf16.msra.mxu0 0
    %626 = vmatprep.subr.bf16.mxu0 0
    %627 = vmatpush1.bf16.msra.mxu0 0
    %628 = vmatprep.subr.bf16.mxu0 0
    %629 = vmatpush1.bf16.msra.mxu0 0
    %630 = vmatprep.subr.bf16.mxu0 0
    %631 = vmatpush1.bf16.msra.mxu0 0
    %632 = vmatprep.subr.bf16.mxu0 0
    %633 = vmatpush1.bf16.msra.mxu0 0
    %634 = vmatprep.subr.bf16.mxu0 0
    %635 = vmatpush1.bf16.msra.mxu0 0
    %636 = vmatprep.subr.bf16.mxu0 0
    %637 = vmatpush1.bf16.msra.mxu0 0
    %638 = vmatprep.subr.bf16.mxu0 0
    %639 = vmatpush1.bf16.msra.mxu0 0
    %640 = vmatprep.subr.bf16.mxu0 0
    %641 = vmatpush1.bf16.msra.mxu0 0
    %642 = vmatprep.mubr.bf16.mxu0 0
    %643 = vmatmul.mubr.bf16.gmra.mrb[0].mxu0 %v608
    %v644 = vpop.f32.mrb[0].mxu0
    %v645 = vadd.f32 0.0, %v644
    %v646 = vpop.f32.mrb[0].mxu0
    %v647 = vpop.f32.mrb[0].mxu0
    %v648 = vadd.f32 0.0, %v647
    %v649 = vpop.f32.mrb[0].mxu0
    %650 = vdwg.mxu0
    %651 = vrot.lane.b32.xlu0 %v274, 104
    %v652 = vpop.permute.xlu0 %651
    %653 = vrot.lane.b32.xlu0 %v274, 72
    %v654 = vpop.permute.xlu0 %653
    %v656 = vsel %vm278, %v652, 0
    %v659 = vsel %vm278, %v654, 0
    %661 = vmatprep.subr.bf16.mxu0 0
    %662 = vmatpush1.bf16.xpose.msra.mxu0 %v659
    %663 = vmatprep.subr.bf16.mxu0 0
    %664 = vmatpush1.bf16.xpose.msra.mxu0 0
    %665 = vmatprep.subr.bf16.mxu0 0
    %666 = vmatpush1.bf16.xpose.msra.mxu0 0
    %667 = vmatprep.subr.bf16.mxu0 0
    %668 = vmatpush1.bf16.xpose.msra.mxu0 0
    %669 = vmatprep.subr.bf16.mxu0 0
    %670 = vmatpush1.bf16.xpose.msra.mxu0 0
    %671 = vmatprep.subr.bf16.mxu0 0
    %672 = vmatpush1.bf16.xpose.msra.mxu0 0
    %673 = vmatprep.subr.bf16.mxu0 0
    %674 = vmatpush1.bf16.xpose.msra.mxu0 0
    %675 = vmatprep.subr.bf16.mxu0 0
    %676 = vmatpush1.bf16.xpose.msra.mxu0 0
    %677 = vmatprep.subr.bf16.mxu0 0
    %678 = vmatpush1.bf16.xpose.msra.mxu0 0
    %679 = vmatprep.subr.bf16.mxu0 0
    %680 = vmatpush1.bf16.xpose.msra.mxu0 0
    %681 = vmatprep.subr.bf16.mxu0 0
    %682 = vmatpush1.bf16.xpose.msra.mxu0 0
    %683 = vmatprep.subr.bf16.mxu0 0
    %684 = vmatpush1.bf16.xpose.msra.mxu0 0
    %685 = vmatprep.subr.bf16.mxu0 0
    %686 = vmatpush1.bf16.xpose.msra.mxu0 0
    %687 = vmatprep.subr.bf16.mxu0 0
    %688 = vmatpush1.bf16.xpose.msra.mxu0 0
    %689 = vmatprep.subr.bf16.mxu0 0
    %690 = vmatpush1.bf16.xpose.msra.mxu0 0
    %691 = vmatprep.subr.bf16.mxu0 0
    %692 = vmatpush1.bf16.xpose.msra.mxu0 0
    %693 = vmatprep.mubr.bf16.mxu0 0
    %694 = vmatmul.mubr.bf16.gmra.mrb[0].mxu0 %v656
    %v695 = vpop.f32.mrb[0].mxu0
    %v696 = vadd.f32 0.0, %v695
    %v697 = vpop.f32.mrb[0].mxu0
    %v698 = vpop.f32.mrb[0].mxu0
    %v699 = vadd.f32 0.0, %v698
    %v700 = vpop.f32.mrb[0].mxu0
    %701 = vdwg.mxu0
    %v702 = vmul.f32 %v696, 0.35355338
    %v703 = vmul.f32 %v699, 0.35355338
    %v704 = vadd.f32 %v702, %v207
    %v705 = vadd.f32 %v703, %v208
    %v706 = vsel %vm330, %v704, -inf
    %707 = vmax.xlane.f32.xlu0 %v706
    %v708 = vpop.xlane.xlu0 %707
    %v709 = vsel %vm330, %v705, -inf
    %710 = vmax.xlane.f32.xlu0 %v709
    %v711 = vpop.xlane.xlu0 %710
    %v712 = vsub.f32 %v704, %v708
    %v713 = vsub.f32 %v705, %v711
    %v714 = vmul.f32 %v712, 1.442695
    %v715 = vpow.pop %v714
    %v716 = vmul.f32 %v713, 1.442695
    %v717 = vpow.pop %v716
    %v718 = vsel %vm330, %v715, 0.0
    %719 = vadd.xlane.f32.xlu0 %v718
    %v720 = vpop.xlane.xlu0 %719
    %v721 = vsel %vm330, %v717, 0.0
    %722 = vadd.xlane.f32.xlu0 %v721
    %v723 = vpop.xlane.xlu0 %722
    %v724 = vrcp.pop %v720
    %v725 = vrcp.pop %v723
    %v726 = vmul.f32 %v715, %v724
    %v727 = vmul.f32 %v717, %v725
    %v728 = vpack.c.bf16 %v727, %v726
    %729 = vrot.lane.b32.xlu0 %v274, 40
    %v730 = vpop.permute.xlu0 %729
    %v733 = vsel %vm330, %v728, 0
    %735 = vmatprep.subr.bf16.mxu0 0
    %736 = vmatpush1.bf16.msra.mxu0 %v730
    %737 = vmatprep.subr.bf16.mxu0 0
    %738 = vmatpush1.bf16.msra.mxu0 0
    %739 = vmatprep.subr.bf16.mxu0 0
    %740 = vmatpush1.bf16.msra.mxu0 0
    %741 = vmatprep.subr.bf16.mxu0 0
    %742 = vmatpush1.bf16.msra.mxu0 0
    %743 = vmatprep.subr.bf16.mxu0 0
    %744 = vmatpush1.bf16.msra.mxu0 0
    %745 = vmatprep.subr.bf16.mxu0 0
    %746 = vmatpush1.bf16.msra.mxu0 0
    %747 = vmatprep.subr.bf16.mxu0 0
    %748 = vmatpush1.bf16.msra.mxu0 0
    %749 = vmatprep.subr.bf16.mxu0 0
    %750 = vmatpush1.bf16.msra.mxu0 0
    %751 = vmatprep.subr.bf16.mxu0 0
    %752 = vmatpush1.bf16.msra.mxu0 0
    %753 = vmatprep.subr.bf16.mxu0 0
    %754 = vmatpush1.bf16.msra.mxu0 0
    %755 = vmatprep.subr.bf16.mxu0 0
    %756 = vmatpush1.bf16.msra.mxu0 0
    %757 = vmatprep.subr.bf16.mxu0 0
    %758 = vmatpush1.bf16.msra.mxu0 0
    %759 = vmatprep.subr.bf16.mxu0 0
    %760 = vmatpush1.bf16.msra.mxu0 0
    %761 = vmatprep.subr.bf16.mxu0 0
    %762 = vmatpush1.bf16.msra.mxu0 0
    %763 = vmatprep.subr.bf16.mxu0 0
    %764 = vmatpush1.bf16.msra.mxu0 0
    %765 = vmatprep.subr.bf16.mxu0 0
    %766 = vmatpush1.bf16.msra.mxu0 0
    %767 = vmatprep.mubr.bf16.mxu0 0
    %768 = vmatmul.mubr.bf16.gmra.mrb[0].mxu0 %v733
    %v769 = vpop.f32.mrb[0].mxu0
    %v770 = vadd.f32 0.0, %v769
    %v771 = vpop.f32.mrb[0].mxu0
    %v772 = vpop.f32.mrb[0].mxu0
    %v773 = vadd.f32 0.0, %v772
    %v774 = vpop.f32.mrb[0].mxu0
    %775 = vdwg.mxu0
    %778 = vrot.lane.b32.xlu0 %v520, 8
    %v779 = vpop.permute.xlu0 %778
    %780 = vrot.lane.b32.xlu0 %v523, 8
    %v781 = vpop.permute.xlu0 %780
    %786 = vrot.lane.b32.xlu0 %v645, 16
    %v787 = vpop.permute.xlu0 %786
    %788 = vrot.lane.b32.xlu0 %v648, 16
    %v789 = vpop.permute.xlu0 %788
    %794 = vrot.lane.b32.xlu0 %v770, 24
    %v795 = vpop.permute.xlu0 %794
    %796 = vrot.lane.b32.xlu0 %v773, 24
    %v797 = vpop.permute.xlu0 %796
    %v800 = vsel %vm278, %v395, %v779
    %v801 = vsel %vm278, %v398, %v781
    %v802 = vsel %vm330, %v800, %v787
    %v803 = vsel %vm330, %v801, %v789
    %vm804 = vcmask 195584
    %v805 = vsel %vm804, %v802, %v795
    %v806 = vsel %vm804, %v803, %v797
    %v807 = vpack.c.bf16 %v806, %v805
    %v808 = vld [vmem:[%s3] sm:$0xf]
    %v809 = vld [vmem:[%s3 + $0x4] sm:$0xf]
    %v810 = vld [vmem:[%s3 + $0x8] sm:$0xf]
    %v811 = vld [vmem:[%s3 + $0xc] sm:$0xf]
    %v812 = vlaneseq
    %v813 = vshrl.u32 %v812, 7
    %v814 = vsub.s32 5, %v813
    %v815 = vrot.slane %v33, %v814
    %v820 = vunpack.c.l.b16 %v808
    %v821 = vunpack.c.l.b16 %v809
    %v822 = vunpack.c.l.b16 %v810
    %v823 = vunpack.c.l.b16 %v811
    %v824 = vpack.c.b16 %v821, %v820
    %v825 = vpack.c.b16 %v823, %v822
    %v829 = vsel %vm155, %v807, 0
    %831 = vmatprep.subr.bf16.mxu0 0
    %832 = vmatpush1.bf16.msra.mxu0 %v824
    %833 = vmatprep.subr.bf16.mxu0 0
    %834 = vmatpush1.bf16.msra.mxu0 %v825
    %835 = vmatprep.subr.bf16.mxu0 0
    %836 = vmatpush1.bf16.msra.mxu0 0
    %837 = vmatprep.subr.bf16.mxu0 0
    %838 = vmatpush1.bf16.msra.mxu0 0
    %839 = vmatprep.subr.bf16.mxu0 0
    %840 = vmatpush1.bf16.msra.mxu0 0
    %841 = vmatprep.subr.bf16.mxu0 0
    %842 = vmatpush1.bf16.msra.mxu0 0
    %843 = vmatprep.subr.bf16.mxu0 0
    %844 = vmatpush1.bf16.msra.mxu0 0
    %845 = vmatprep.subr.bf16.mxu0 0
    %846 = vmatpush1.bf16.msra.mxu0 0
    %847 = vmatprep.subr.bf16.mxu0 0
    %848 = vmatpush1.bf16.msra.mxu0 0
    %849 = vmatprep.subr.bf16.mxu0 0
    %850 = vmatpush1.bf16.msra.mxu0 0
    %851 = vmatprep.subr.bf16.mxu0 0
    %852 = vmatpush1.bf16.msra.mxu0 0
    %853 = vmatprep.subr.bf16.mxu0 0
    %854 = vmatpush1.bf16.msra.mxu0 0
    %855 = vmatprep.subr.bf16.mxu0 0
    %856 = vmatpush1.bf16.msra.mxu0 0
    %857 = vmatprep.subr.bf16.mxu0 0
    %858 = vmatpush1.bf16.msra.mxu0 0
    %859 = vmatprep.subr.bf16.mxu0 0
    %860 = vmatpush1.bf16.msra.mxu0 0
    %861 = vmatprep.subr.bf16.mxu0 0
    %862 = vmatpush1.bf16.msra.mxu0 0
    %863 = vmatprep.mubr.bf16.mxu0 0
    %864 = vmatmul.mubr.bf16.gmra.mrb[0].mxu0 %v829
    %v865 = vpop.f32.mrb[0].mxu0
    %v866 = vadd.f32 %v815, %v865
    %v867 = vpop.f32.mrb[0].mxu0
    %v868 = vpop.f32.mrb[0].mxu0
    %v869 = vadd.f32 %v815, %v868
    %v870 = vpop.f32.mrb[0].mxu0
    %871 = vdwg.mxu0
    %v872 = vadd.f32 %v866, %v193
    %v873 = vadd.f32 %v869, %v194
    %v874 = vsel %vm155, %v872, 0.0
    %875 = vadd.xlane.f32.xlu0 %v874
    %v876 = vpop.xlane.xlu0 %875
    %v877 = vsel %vm155, %v873, 0.0
    %878 = vadd.xlane.f32.xlu0 %v877
    %v879 = vpop.xlane.xlu0 %878
    %v880 = vmul.f32 %v876, %v162
    %v881 = vmul.f32 %v879, %v162
    %v882 = vsub.f32 %v872, %v880
    %v883 = vsub.f32 %v873, %v881
    %v884 = vmul.f32 %v882, %v882
    %v885 = vmul.f32 %v883, %v883
    %v886 = vsel %vm155, %v884, 0.0
    %887 = vadd.xlane.f32.xlu0 %v886
    %v888 = vpop.xlane.xlu0 %887
    %v889 = vsel %vm155, %v885, 0.0
    %890 = vadd.xlane.f32.xlu0 %v889
    %v891 = vpop.xlane.xlu0 %890
    %v892 = vmul.f32 %v888, %v162
    %v893 = vmul.f32 %v891, %v162
    %v894 = vadd.f32 %v892, 1e-12
    %v895 = vadd.f32 %v893, 1e-12
    %v896 = vrsqrt.pop %v894
    %v897 = vrsqrt.pop %v895
    %v898 = vmul.f32 %v882, %v896
    %v899 = vmul.f32 %v883, %v897
    %v900 = vlaneseq
    %v901 = vshrl.u32 %v900, 7
    %v902 = vsub.s32 6, %v901
    %v903 = vrot.slane %v33, %v902
    %v904 = vmul.f32 %v898, %v903
    %v905 = vmul.f32 %v899, %v903
    %v906 = vlaneseq
    %v907 = vshrl.u32 %v906, 7
    %v908 = vsub.s32 7, %v907
    %v909 = vrot.slane %v33, %v908
    %v910 = vadd.f32 %v904, %v909
    %v911 = vadd.f32 %v905, %v909
    %v912 = vpack.c.bf16 %v911, %v910
    %v913 = vld [vmem:[%s4] sm:$0xf]
    %v914 = vld [vmem:[%s4 + $0x4] sm:$0xf]
    %v915 = vld [vmem:[%s4 + $0x8] sm:$0xf]
    %v916 = vld [vmem:[%s4 + $0xc] sm:$0xf]
    %v917 = vlaneseq
    %v918 = vshrl.u32 %v917, 7
    %v919 = vsub.s32 0, %v918
    %v920 = vrot.slane %v34, %v919
    %v925 = vunpack.c.l.b16 %v913
    %v926 = vunpack.c.l.b16 %v914
    %v927 = vunpack.c.l.b16 %v915
    %v928 = vunpack.c.l.b16 %v916
    %v929 = vpack.c.b16 %v926, %v925
    %v930 = vpack.c.b16 %v928, %v927
    %v934 = vsel %vm155, %v912, 0
    %936 = vmatprep.subr.bf16.mxu0 0
    %937 = vmatpush1.bf16.msra.mxu0 %v929
    %938 = vmatprep.subr.bf16.mxu0 0
    %939 = vmatpush1.bf16.msra.mxu0 %v930
    %940 = vmatprep.subr.bf16.mxu0 0
    %941 = vmatpush1.bf16.msra.mxu0 0
    %942 = vmatprep.subr.bf16.mxu0 0
    %943 = vmatpush1.bf16.msra.mxu0 0
    %944 = vmatprep.subr.bf16.mxu0 0
    %945 = vmatpush1.bf16.msra.mxu0 0
    %946 = vmatprep.subr.bf16.mxu0 0
    %947 = vmatpush1.bf16.msra.mxu0 0
    %948 = vmatprep.subr.bf16.mxu0 0
    %949 = vmatpush1.bf16.msra.mxu0 0
    %950 = vmatprep.subr.bf16.mxu0 0
    %951 = vmatpush1.bf16.msra.mxu0 0
    %952 = vmatprep.subr.bf16.mxu0 0
    %953 = vmatpush1.bf16.msra.mxu0 0
    %954 = vmatprep.subr.bf16.mxu0 0
    %955 = vmatpush1.bf16.msra.mxu0 0
    %956 = vmatprep.subr.bf16.mxu0 0
    %957 = vmatpush1.bf16.msra.mxu0 0
    %958 = vmatprep.subr.bf16.mxu0 0
    %959 = vmatpush1.bf16.msra.mxu0 0
    %960 = vmatprep.subr.bf16.mxu0 0
    %961 = vmatpush1.bf16.msra.mxu0 0
    %962 = vmatprep.subr.bf16.mxu0 0
    %963 = vmatpush1.bf16.msra.mxu0 0
    %964 = vmatprep.subr.bf16.mxu0 0
    %965 = vmatpush1.bf16.msra.mxu0 0
    %966 = vmatprep.subr.bf16.mxu0 0
    %967 = vmatpush1.bf16.msra.mxu0 0
    %968 = vmatprep.mubr.bf16.mxu0 0
    %969 = vmatmul.mubr.bf16.gmra.mrb[0].mxu0 %v934
    %v970 = vpop.f32.mrb[0].mxu0
    %v971 = vadd.f32 %v920, %v970
    %v972 = vpop.f32.mrb[0].mxu0
    %v973 = vpop.f32.mrb[0].mxu0
    %v974 = vadd.f32 %v920, %v973
    %v975 = vpop.f32.mrb[0].mxu0
    %976 = vdwg.mxu0
    %v977 = vmul.f32 %v971, 0.5
    %v978 = vmul.f32 %v974, 0.5
    %v979 = vmul.f32 %v971, 0.044715
    %v980 = vmul.f32 %v974, 0.044715
    %v981 = vmul.f32 %v979, %v971
    %v982 = vmul.f32 %v980, %v974
    %v983 = vmul.f32 %v981, %v971
    %v984 = vmul.f32 %v982, %v974
    %v985 = vadd.f32 %v971, %v983
    %v986 = vadd.f32 %v974, %v984
    %v987 = vmul.f32 %v985, 0.7978846
    %v988 = vmul.f32 %v986, 0.7978846
    %v989 = vtanh.pop %v987
    %v990 = vtanh.pop %v988
    %v991 = vadd.f32 %v989, 1.0
    %v992 = vadd.f32 %v990, 1.0
    %v993 = vmul.f32 %v977, %v991
    %v994 = vmul.f32 %v978, %v992
    %v995 = vpack.c.bf16 %v994, %v993
    %v996 = vld [vmem:[%s5] sm:$0xf]
    %v997 = vld [vmem:[%s5 + $0x4] sm:$0xf]
    %v998 = vld [vmem:[%s5 + $0x8] sm:$0xf]
    %v999 = vld [vmem:[%s5 + $0xc] sm:$0xf]
    %v1000 = vld [vmem:[%s5 + $0x10] sm:$0xf]
    %v1001 = vld [vmem:[%s5 + $0x14] sm:$0xf]
    %v1002 = vld [vmem:[%s5 + $0x18] sm:$0xf]
    %v1003 = vld [vmem:[%s5 + $0x1c] sm:$0xf]
    %v1004 = vlaneseq
    %v1005 = vshrl.u32 %v1004, 7
    %v1006 = vsub.s32 1, %v1005
    %v1007 = vrot.slane %v34, %v1006
    %v1016 = vunpack.c.l.b16 %v996
    %v1017 = vunpack.c.l.b16 %v997
    %v1018 = vunpack.c.l.b16 %v998
    %v1019 = vunpack.c.l.b16 %v999
    %v1020 = vunpack.c.l.b16 %v1000
    %v1021 = vunpack.c.l.b16 %v1001
    %v1022 = vunpack.c.l.b16 %v1002
    %v1023 = vunpack.c.l.b16 %v1003
    %v1024 = vpack.c.b16 %v1017, %v1016
    %v1025 = vpack.c.b16 %v1019, %v1018
    %v1026 = vpack.c.b16 %v1021, %v1020
    %v1027 = vpack.c.b16 %v1023, %v1022
    %v1033 = vsel %vm67, %v995, 0
    %1035 = vmatprep.subr.bf16.mxu0 0
    %1036 = vmatpush1.bf16.msra.mxu0 %v1024
    %1037 = vmatprep.subr.bf16.mxu0 0
    %1038 = vmatpush1.bf16.msra.mxu0 %v1025
    %1039 = vmatprep.subr.bf16.mxu0 0
    %1040 = vmatpush1.bf16.msra.mxu0 %v1026
    %1041 = vmatprep.subr.bf16.mxu0 0
    %1042 = vmatpush1.bf16.msra.mxu0 %v1027
    %1043 = vmatprep.subr.bf16.mxu0 0
    %1044 = vmatpush1.bf16.msra.mxu0 0
    %1045 = vmatprep.subr.bf16.mxu0 0
    %1046 = vmatpush1.bf16.msra.mxu0 0
    %1047 = vmatprep.subr.bf16.mxu0 0
    %1048 = vmatpush1.bf16.msra.mxu0 0
    %1049 = vmatprep.subr.bf16.mxu0 0
    %1050 = vmatpush1.bf16.msra.mxu0 0
    %1051 = vmatprep.subr.bf16.mxu0 0
    %1052 = vmatpush1.bf16.msra.mxu0 0
    %1053 = vmatprep.subr.bf16.mxu0 0
    %1054 = vmatpush1.bf16.msra.mxu0 0
    %1055 = vmatprep.subr.bf16.mxu0 0
    %1056 = vmatpush1.bf16.msra.mxu0 0
    %1057 = vmatprep.subr.bf16.mxu0 0
    %1058 = vmatpush1.bf16.msra.mxu0 0
    %1059 = vmatprep.subr.bf16.mxu0 0
    %1060 = vmatpush1.bf16.msra.mxu0 0
    %1061 = vmatprep.subr.bf16.mxu0 0
    %1062 = vmatpush1.bf16.msra.mxu0 0
    %1063 = vmatprep.subr.bf16.mxu0 0
    %1064 = vmatpush1.bf16.msra.mxu0 0
    %1065 = vmatprep.subr.bf16.mxu0 0
    %1066 = vmatpush1.bf16.msra.mxu0 0
    %1067 = vmatprep.mubr.bf16.mxu0 0
    %1068 = vmatmul.mubr.bf16.gmra.mrb[0].mxu0 %v1033
    %v1069 = vpop.f32.mrb[0].mxu0
    %v1070 = vadd.f32 %v1007, %v1069
    %v1071 = vpop.f32.mrb[0].mxu0
    %v1072 = vpop.f32.mrb[0].mxu0
    %v1073 = vadd.f32 %v1007, %v1072
    %v1074 = vpop.f32.mrb[0].mxu0
    %1075 = vdwg.mxu0
    %v1076 = vadd.f32 %v1070, %v910
    %v1077 = vadd.f32 %v1073, %v911
    %v1078 = vsel %vm155, %v1076, 0.0
    %1079 = vadd.xlane.f32.xlu0 %v1078
    %v1080 = vpop.xlane.xlu0 %1079
    %v1081 = vsel %vm155, %v1077, 0.0
    %1082 = vadd.xlane.f32.xlu0 %v1081
    %v1083 = vpop.xlane.xlu0 %1082
    %v1084 = vmul.f32 %v1080, %v162
    %v1085 = vmul.f32 %v1083, %v162
    %v1086 = vsub.f32 %v1076, %v1084
    %v1087 = vsub.f32 %v1077, %v1085
    %v1088 = vmul.f32 %v1086, %v1086
    %v1089 = vmul.f32 %v1087, %v1087
    %v1090 = vsel %vm155, %v1088, 0.0
    %1091 = vadd.xlane.f32.xlu0 %v1090
    %v1092 = vpop.xlane.xlu0 %1091
    %v1093 = vsel %vm155, %v1089, 0.0
    %1094 = vadd.xlane.f32.xlu0 %v1093
    %v1095 = vpop.xlane.xlu0 %1094
    %v1096 = vmul.f32 %v1092, %v162
    %v1097 = vmul.f32 %v1095, %v162
    %v1098 = vadd.f32 %v1096, 1e-12
    %v1099 = vadd.f32 %v1097, 1e-12
    %v1100 = vrsqrt.pop %v1098
    %v1101 = vrsqrt.pop %v1099
    %v1102 = vmul.f32 %v1086, %v1100
    %v1103 = vmul.f32 %v1087, %v1101
    %v1104 = vlaneseq
    %v1105 = vshrl.u32 %v1104, 7
    %v1106 = vsub.s32 2, %v1105
    %v1107 = vrot.slane %v34, %v1106
    %v1108 = vmul.f32 %v1102, %v1107
    %v1109 = vmul.f32 %v1103, %v1107
    %v1110 = vlaneseq
    %v1111 = vshrl.u32 %v1110, 7
    %v1112 = vsub.s32 3, %v1111
    %v1113 = vrot.slane %v34, %v1112
    %v1114 = vadd.f32 %v1108, %v1113
    %v1115 = vadd.f32 %v1109, %v1113
    %v1116 = vpack.c.bf16 %v1115, %v1114
    %s1117 = scalar_lea.vmem %s2, 16
    %v1118 = vld [vmem:[%s1117] sm:$0xf]
    %v1119 = vld [vmem:[%s1117 + $0x4] sm:$0xf]
    %v1120 = vld [vmem:[%s1117 + $0x8] sm:$0xf]
    %v1121 = vld [vmem:[%s1117 + $0xc] sm:$0xf]
    %v1122 = vlaneseq
    %v1123 = vshrl.u32 %v1122, 7
    %v1124 = vsub.s32 4, %v1123
    %v1125 = vrot.slane %v34, %v1124
    %v1130 = vunpack.c.l.b16 %v1118
    %v1131 = vunpack.c.l.b16 %v1119
    %v1132 = vunpack.c.l.b16 %v1120
    %v1133 = vunpack.c.l.b16 %v1121
    %v1134 = vpack.c.b16 %v1131, %v1130
    %v1135 = vpack.c.b16 %v1133, %v1132
    %v1139 = vsel %vm155, %v1116, 0
    %1141 = vmatprep.subr.bf16.mxu0 0
    %1142 = vmatpush1.bf16.msra.mxu0 %v1134
    %1143 = vmatprep.subr.bf16.mxu0 0
    %1144 = vmatpush1.bf16.msra.mxu0 %v1135
    %1145 = vmatprep.subr.bf16.mxu0 0
    %1146 = vmatpush1.bf16.msra.mxu0 0
    %1147 = vmatprep.subr.bf16.mxu0 0
    %1148 = vmatpush1.bf16.msra.mxu0 0
    %1149 = vmatprep.subr.bf16.mxu0 0
    %1150 = vmatpush1.bf16.msra.mxu0 0
    %1151 = vmatprep.subr.bf16.mxu0 0
    %1152 = vmatpush1.bf16.msra.mxu0 0
    %1153 = vmatprep.subr.bf16.mxu0 0
    %1154 = vmatpush1.bf16.msra.mxu0 0
    %1155 = vmatprep.subr.bf16.mxu0 0
    %1156 = vmatpush1.bf16.msra.mxu0 0
    %1157 = vmatprep.subr.bf16.mxu0 0
    %1158 = vmatpush1.bf16.msra.mxu0 0
    %1159 = vmatprep.subr.bf16.mxu0 0
    %1160 = vmatpush1.bf16.msra.mxu0 0
    %1161 = vmatprep.subr.bf16.mxu0 0
    %1162 = vmatpush1.bf16.msra.mxu0 0
    %1163 = vmatprep.subr.bf16.mxu0 0
    %1164 = vmatpush1.bf16.msra.mxu0 0
    %1165 = vmatprep.subr.bf16.mxu0 0
    %1166 = vmatpush1.bf16.msra.mxu0 0
    %1167 = vmatprep.subr.bf16.mxu0 0
    %1168 = vmatpush1.bf16.msra.mxu0 0
    %1169 = vmatprep.subr.bf16.mxu0 0
    %1170 = vmatpush1.bf16.msra.mxu0 0
    %1171 = vmatprep.subr.bf16.mxu0 0
    %1172 = vmatpush1.bf16.msra.mxu0 0
    %1173 = vmatprep.mubr.bf16.mxu0 0
    %1174 = vmatmul.mubr.bf16.gmra.mrb[0].mxu0 %v1139
    %v1175 = vpop.f32.mrb[0].mxu0
    %v1176 = vadd.f32 %v1125, %v1175
    %v1177 = vpop.f32.mrb[0].mxu0
    %v1178 = vpop.f32.mrb[0].mxu0
    %v1179 = vadd.f32 %v1125, %v1178
    %v1180 = vpop.f32.mrb[0].mxu0
    %1181 = vdwg.mxu0
    %v1182 = vpack.c.bf16 %v1179, %v1176
    %1184 = vrot.lane.b32.xlu0 %v1182, 96
    %v1185 = vpop.permute.xlu0 %1184
    %v1187 = vsel %vm278, %v1182, 0
    %v1190 = vsel %vm278, %v1185, 0
    %1192 = vmatprep.subr.bf16.mxu0 0
    %1193 = vmatpush1.bf16.xpose.msra.mxu0 %v1190
    %1194 = vmatprep.subr.bf16.mxu0 0
    %1195 = vmatpush1.bf16.xpose.msra.mxu0 0
    %1196 = vmatprep.subr.bf16.mxu0 0
    %1197 = vmatpush1.bf16.xpose.msra.mxu0 0
    %1198 = vmatprep.subr.bf16.mxu0 0
    %1199 = vmatpush1.bf16.xpose.msra.mxu0 0
    %1200 = vmatprep.subr.bf16.mxu0 0
    %1201 = vmatpush1.bf16.xpose.msra.mxu0 0
    %1202 = vmatprep.subr.bf16.mxu0 0
    %1203 = vmatpush1.bf16.xpose.msra.mxu0 0
    %1204 = vmatprep.subr.bf16.mxu0 0
    %1205 = vmatpush1.bf16.xpose.msra.mxu0 0
    %1206 = vmatprep.subr.bf16.mxu0 0
    %1207 = vmatpush1.bf16.xpose.msra.mxu0 0
    %1208 = vmatprep.subr.bf16.mxu0 0
    %1209 = vmatpush1.bf16.xpose.msra.mxu0 0
    %1210 = vmatprep.subr.bf16.mxu0 0
    %1211 = vmatpush1.bf16.xpose.msra.mxu0 0
    %1212 = vmatprep.subr.bf16.mxu0 0
    %1213 = vmatpush1.bf16.xpose.msra.mxu0 0
    %1214 = vmatprep.subr.bf16.mxu0 0
    %1215 = vmatpush1.bf16.xpose.msra.mxu0 0
    %1216 = vmatprep.subr.bf16.mxu0 0
    %1217 = vmatpush1.bf16.xpose.msra.mxu0 0
    %1218 = vmatprep.subr.bf16.mxu0 0
    %1219 = vmatpush1.bf16.xpose.msra.mxu0 0
    %1220 = vmatprep.subr.bf16.mxu0 0
    %1221 = vmatpush1.bf16.xpose.msra.mxu0 0
    %1222 = vmatprep.subr.bf16.mxu0 0
    %1223 = vmatpush1.bf16.xpose.msra.mxu0 0
    %1224 = vmatprep.mubr.bf16.mxu0 0
    %1225 = vmatmul.mubr.bf16.gmra.mrb[0].mxu0 %v1187
    %v1226 = vpop.f32.mrb[0].mxu0
    %v1227 = vadd.f32 0.0, %v1226
    %v1228 = vpop.f32.mrb[0].mxu0
    %v1229 = vpop.f32.mrb[0].mxu0
    %v1230 = vadd.f32 0.0, %v1229
    %v1231 = vpop.f32.mrb[0].mxu0
    %1232 = vdwg.mxu0
    %v1233 = vmul.f32 %v1227, 0.35355338
    %v1234 = vmul.f32 %v1230, 0.35355338
    %v1235 = vadd.f32 %v1233, %v207
    %v1236 = vadd.f32 %v1234, %v208
    %v1237 = vsel %vm330, %v1235, -inf
    %1238 = vmax.xlane.f32.xlu0 %v1237
    %v1239 = vpop.xlane.xlu0 %1238
    %v1240 = vsel %vm330, %v1236, -inf
    %1241 = vmax.xlane.f32.xlu0 %v1240
    %v1242 = vpop.xlane.xlu0 %1241
    %v1243 = vsub.f32 %v1235, %v1239
    %v1244 = vsub.f32 %v1236, %v1242
    %v1245 = vmul.f32 %v1243, 1.442695
    %v1246 = vpow.pop %v1245
    %v1247 = vmul.f32 %v1244, 1.442695
    %v1248 = vpow.pop %v1247
    %v1249 = vsel %vm330, %v1246, 0.0
    %1250 = vadd.xlane.f32.xlu0 %v1249
    %v1251 = vpop.xlane.xlu0 %1250
    %v1252 = vsel %vm330, %v1248, 0.0
    %1253 = vadd.xlane.f32.xlu0 %v1252
    %v1254 = vpop.xlane.xlu0 %1253
    %v1255 = vrcp.pop %v1251
    %v1256 = vrcp.pop %v1254
    %v1257 = vmul.f32 %v1246, %v1255
    %v1258 = vmul.f32 %v1248, %v1256
    %v1259 = vpack.c.bf16 %v1258, %v1257
    %1260 = vrot.lane.b32.xlu0 %v1182, 64
    %v1261 = vpop.permute.xlu0 %1260
    %v1264 = vsel %vm330, %v1259, 0
    %1266 = vmatprep.subr.bf16.mxu0 0
    %1267 = vmatpush1.bf16.msra.mxu0 %v1261
    %1268 = vmatprep.subr.bf16.mxu0 0
    %1269 = vmatpush1.bf16.msra.mxu0 0
    %1270 = vmatprep.subr.bf16.mxu0 0
    %1271 = vmatpush1.bf16.msra.mxu0 0
    %1272 = vmatprep.subr.bf16.mxu0 0
    %1273 = vmatpush1.bf16.msra.mxu0 0
    %1274 = vmatprep.subr.bf16.mxu0 0
    %1275 = vmatpush1.bf16.msra.mxu0 0
    %1276 = vmatprep.subr.bf16.mxu0 0
    %1277 = vmatpush1.bf16.msra.mxu0 0
    %1278 = vmatprep.subr.bf16.mxu0 0
    %1279 = vmatpush1.bf16.msra.mxu0 0
    %1280 = vmatprep.subr.bf16.mxu0 0
    %1281 = vmatpush1.bf16.msra.mxu0 0
    %1282 = vmatprep.subr.bf16.mxu0 0
    %1283 = vmatpush1.bf16.msra.mxu0 0
    %1284 = vmatprep.subr.bf16.mxu0 0
    %1285 = vmatpush1.bf16.msra.mxu0 0
    %1286 = vmatprep.subr.bf16.mxu0 0
    %1287 = vmatpush1.bf16.msra.mxu0 0
    %1288 = vmatprep.subr.bf16.mxu0 0
    %1289 = vmatpush1.bf16.msra.mxu0 0
    %1290 = vmatprep.subr.bf16.mxu0 0
    %1291 = vmatpush1.bf16.msra.mxu0 0
    %1292 = vmatprep.subr.bf16.mxu0 0
    %1293 = vmatpush1.bf16.msra.mxu0 0
    %1294 = vmatprep.subr.bf16.mxu0 0
    %1295 = vmatpush1.bf16.msra.mxu0 0
    %1296 = vmatprep.subr.bf16.mxu0 0
    %1297 = vmatpush1.bf16.msra.mxu0 0
    %1298 = vmatprep.mubr.bf16.mxu0 0
    %1299 = vmatmul.mubr.bf16.gmra.mrb[0].mxu0 %v1264
    %v1300 = vpop.f32.mrb[0].mxu0
    %v1301 = vadd.f32 0.0, %v1300
    %v1302 = vpop.f32.mrb[0].mxu0
    %v1303 = vpop.f32.mrb[0].mxu0
    %v1304 = vadd.f32 0.0, %v1303
    %v1305 = vpop.f32.mrb[0].mxu0
    %1306 = vdwg.mxu0
    %1307 = vrot.lane.b32.xlu0 %v1182, 120
    %v1308 = vpop.permute.xlu0 %1307
    %1309 = vrot.lane.b32.xlu0 %v1182, 88
    %v1310 = vpop.permute.xlu0 %1309
    %v1312 = vsel %vm278, %v1308, 0
    %v1315 = vsel %vm278, %v1310, 0
    %1317 = vmatprep.subr.bf16.mxu0 0
    %1318 = vmatpush1.bf16.xpose.msra.mxu0 %v1315
    %1319 = vmatprep.subr.bf16.mxu0 0
    %1320 = vmatpush1.bf16.xpose.msra.mxu0 0
    %1321 = vmatprep.subr.bf16.mxu0 0
    %1322 = vmatpush1.bf16.xpose.msra.mxu0 0
    %1323 = vmatprep.subr.bf16.mxu0 0
    %1324 = vmatpush1.bf16.xpose.msra.mxu0 0
    %1325 = vmatprep.subr.bf16.mxu0 0
    %1326 = vmatpush1.bf16.xpose.msra.mxu0 0
    %1327 = vmatprep.subr.bf16.mxu0 0
    %1328 = vmatpush1.bf16.xpose.msra.mxu0 0
    %1329 = vmatprep.subr.bf16.mxu0 0
    %1330 = vmatpush1.bf16.xpose.msra.mxu0 0
    %1331 = vmatprep.subr.bf16.mxu0 0
    %1332 = vmatpush1.bf16.xpose.msra.mxu0 0
    %1333 = vmatprep.subr.bf16.mxu0 0
    %1334 = vmatpush1.bf16.xpose.msra.mxu0 0
    %1335 = vmatprep.subr.bf16.mxu0 0
    %1336 = vmatpush1.bf16.xpose.msra.mxu0 0
    %1337 = vmatprep.subr.bf16.mxu0 0
    %1338 = vmatpush1.bf16.xpose.msra.mxu0 0
    %1339 = vmatprep.subr.bf16.mxu0 0
    %1340 = vmatpush1.bf16.xpose.msra.mxu0 0
    %1341 = vmatprep.subr.bf16.mxu0 0
    %1342 = vmatpush1.bf16.xpose.msra.mxu0 0
    %1343 = vmatprep.subr.bf16.mxu0 0
    %1344 = vmatpush1.bf16.xpose.msra.mxu0 0
    %1345 = vmatprep.subr.bf16.mxu0 0
    %1346 = vmatpush1.bf16.xpose.msra.mxu0 0
    %1347 = vmatprep.subr.bf16.mxu0 0
    %1348 = vmatpush1.bf16.xpose.msra.mxu0 0
    %1349 = vmatprep.mubr.bf16.mxu0 0
    %1350 = vmatmul.mubr.bf16.gmra.mrb[0].mxu0 %v1312
    %v1351 = vpop.f32.mrb[0].mxu0
    %v1352 = vadd.f32 0.0, %v1351
    %v1353 = vpop.f32.mrb[0].mxu0
    %v1354 = vpop.f32.mrb[0].mxu0
    %v1355 = vadd.f32 0.0, %v1354
    %v1356 = vpop.f32.mrb[0].mxu0
    %1357 = vdwg.mxu0
    %v1358 = vmul.f32 %v1352, 0.35355338
    %v1359 = vmul.f32 %v1355, 0.35355338
    %v1360 = vadd.f32 %v1358, %v207
    %v1361 = vadd.f32 %v1359, %v208
    %v1362 = vsel %vm330, %v1360, -inf
    %1363 = vmax.xlane.f32.xlu0 %v1362
    %v1364 = vpop.xlane.xlu0 %1363
    %v1365 = vsel %vm330, %v1361, -inf
    %1366 = vmax.xlane.f32.xlu0 %v1365
    %v1367 = vpop.xlane.xlu0 %1366
    %v1368 = vsub.f32 %v1360, %v1364
    %v1369 = vsub.f32 %v1361, %v1367
    %v1370 = vmul.f32 %v1368, 1.442695
    %v1371 = vpow.pop %v1370
    %v1372 = vmul.f32 %v1369, 1.442695
    %v1373 = vpow.pop %v1372
    %v1374 = vsel %vm330, %v1371, 0.0
    %1375 = vadd.xlane.f32.xlu0 %v1374
    %v1376 = vpop.xlane.xlu0 %1375
    %v1377 = vsel %vm330, %v1373, 0.0
    %1378 = vadd.xlane.f32.xlu0 %v1377
    %v1379 = vpop.xlane.xlu0 %1378
    %v1380 = vrcp.pop %v1376
    %v1381 = vrcp.pop %v1379
    %v1382 = vmul.f32 %v1371, %v1380
    %v1383 = vmul.f32 %v1373, %v1381
    %v1384 = vpack.c.bf16 %v1383, %v1382
    %1385 = vrot.lane.b32.xlu0 %v1182, 56
    %v1386 = vpop.permute.xlu0 %1385
    %v1389 = vsel %vm330, %v1384, 0
    %1391 = vmatprep.subr.bf16.mxu0 0
    %1392 = vmatpush1.bf16.msra.mxu0 %v1386
    %1393 = vmatprep.subr.bf16.mxu0 0
    %1394 = vmatpush1.bf16.msra.mxu0 0
    %1395 = vmatprep.subr.bf16.mxu0 0
    %1396 = vmatpush1.bf16.msra.mxu0 0
    %1397 = vmatprep.subr.bf16.mxu0 0
    %1398 = vmatpush1.bf16.msra.mxu0 0
    %1399 = vmatprep.subr.bf16.mxu0 0
    %1400 = vmatpush1.bf16.msra.mxu0 0
    %1401 = vmatprep.subr.bf16.mxu0 0
    %1402 = vmatpush1.bf16.msra.mxu0 0
    %1403 = vmatprep.subr.bf16.mxu0 0
    %1404 = vmatpush1.bf16.msra.mxu0 0
    %1405 = vmatprep.subr.bf16.mxu0 0
    %1406 = vmatpush1.bf16.msra.mxu0 0
    %1407 = vmatprep.subr.bf16.mxu0 0
    %1408 = vmatpush1.bf16.msra.mxu0 0
    %1409 = vmatprep.subr.bf16.mxu0 0
    %1410 = vmatpush1.bf16.msra.mxu0 0
    %1411 = vmatprep.subr.bf16.mxu0 0
    %1412 = vmatpush1.bf16.msra.mxu0 0
    %1413 = vmatprep.subr.bf16.mxu0 0
    %1414 = vmatpush1.bf16.msra.mxu0 0
    %1415 = vmatprep.subr.bf16.mxu0 0
    %1416 = vmatpush1.bf16.msra.mxu0 0
    %1417 = vmatprep.subr.bf16.mxu0 0
    %1418 = vmatpush1.bf16.msra.mxu0 0
    %1419 = vmatprep.subr.bf16.mxu0 0
    %1420 = vmatpush1.bf16.msra.mxu0 0
    %1421 = vmatprep.subr.bf16.mxu0 0
    %1422 = vmatpush1.bf16.msra.mxu0 0
    %1423 = vmatprep.mubr.bf16.mxu0 0
    %1424 = vmatmul.mubr.bf16.gmra.mrb[0].mxu0 %v1389
    %v1425 = vpop.f32.mrb[0].mxu0
    %v1426 = vadd.f32 0.0, %v1425
    %v1427 = vpop.f32.mrb[0].mxu0
    %v1428 = vpop.f32.mrb[0].mxu0
    %v1429 = vadd.f32 0.0, %v1428
    %v1430 = vpop.f32.mrb[0].mxu0
    %1431 = vdwg.mxu0
    %1432 = vrot.lane.b32.xlu0 %v1182, 112
    %v1433 = vpop.permute.xlu0 %1432
    %1434 = vrot.lane.b32.xlu0 %v1182, 80
    %v1435 = vpop.permute.xlu0 %1434
    %v1437 = vsel %vm278, %v1433, 0
    %v1440 = vsel %vm278, %v1435, 0
    %1442 = vmatprep.subr.bf16.mxu0 0
    %1443 = vmatpush1.bf16.xpose.msra.mxu0 %v1440
    %1444 = vmatprep.subr.bf16.mxu0 0
    %1445 = vmatpush1.bf16.xpose.msra.mxu0 0
    %1446 = vmatprep.subr.bf16.mxu0 0
    %1447 = vmatpush1.bf16.xpose.msra.mxu0 0
    %1448 = vmatprep.subr.bf16.mxu0 0
    %1449 = vmatpush1.bf16.xpose.msra.mxu0 0
    %1450 = vmatprep.subr.bf16.mxu0 0
    %1451 = vmatpush1.bf16.xpose.msra.mxu0 0
    %1452 = vmatprep.subr.bf16.mxu0 0
    %1453 = vmatpush1.bf16.xpose.msra.mxu0 0
    %1454 = vmatprep.subr.bf16.mxu0 0
    %1455 = vmatpush1.bf16.xpose.msra.mxu0 0
    %1456 = vmatprep.subr.bf16.mxu0 0
    %1457 = vmatpush1.bf16.xpose.msra.mxu0 0
    %1458 = vmatprep.subr.bf16.mxu0 0
    %1459 = vmatpush1.bf16.xpose.msra.mxu0 0
    %1460 = vmatprep.subr.bf16.mxu0 0
    %1461 = vmatpush1.bf16.xpose.msra.mxu0 0
    %1462 = vmatprep.subr.bf16.mxu0 0
    %1463 = vmatpush1.bf16.xpose.msra.mxu0 0
    %1464 = vmatprep.subr.bf16.mxu0 0
    %1465 = vmatpush1.bf16.xpose.msra.mxu0 0
    %1466 = vmatprep.subr.bf16.mxu0 0
    %1467 = vmatpush1.bf16.xpose.msra.mxu0 0
    %1468 = vmatprep.subr.bf16.mxu0 0
    %1469 = vmatpush1.bf16.xpose.msra.mxu0 0
    %1470 = vmatprep.subr.bf16.mxu0 0
    %1471 = vmatpush1.bf16.xpose.msra.mxu0 0
    %1472 = vmatprep.subr.bf16.mxu0 0
    %1473 = vmatpush1.bf16.xpose.msra.mxu0 0
    %1474 = vmatprep.mubr.bf16.mxu0 0
    %1475 = vmatmul.mubr.bf16.gmra.mrb[0].mxu0 %v1437
    %v1476 = vpop.f32.mrb[0].mxu0
    %v1477 = vadd.f32 0.0, %v1476
    %v1478 = vpop.f32.mrb[0].mxu0
    %v1479 = vpop.f32.mrb[0].mxu0
    %v1480 = vadd.f32 0.0, %v1479
    %v1481 = vpop.f32.mrb[0].mxu0
    %1482 = vdwg.mxu0
    %v1483 = vmul.f32 %v1477, 0.35355338
    %v1484 = vmul.f32 %v1480, 0.35355338
    %v1485 = vadd.f32 %v1483, %v207
    %v1486 = vadd.f32 %v1484, %v208
    %v1487 = vsel %vm330, %v1485, -inf
    %1488 = vmax.xlane.f32.xlu0 %v1487
    %v1489 = vpop.xlane.xlu0 %1488
    %v1490 = vsel %vm330, %v1486, -inf
    %1491 = vmax.xlane.f32.xlu0 %v1490
    %v1492 = vpop.xlane.xlu0 %1491
    %v1493 = vsub.f32 %v1485, %v1489
    %v1494 = vsub.f32 %v1486, %v1492
    %v1495 = vmul.f32 %v1493, 1.442695
    %v1496 = vpow.pop %v1495
    %v1497 = vmul.f32 %v1494, 1.442695
    %v1498 = vpow.pop %v1497
    %v1499 = vsel %vm330, %v1496, 0.0
    %1500 = vadd.xlane.f32.xlu0 %v1499
    %v1501 = vpop.xlane.xlu0 %1500
    %v1502 = vsel %vm330, %v1498, 0.0
    %1503 = vadd.xlane.f32.xlu0 %v1502
    %v1504 = vpop.xlane.xlu0 %1503
    %v1505 = vrcp.pop %v1501
    %v1506 = vrcp.pop %v1504
    %v1507 = vmul.f32 %v1496, %v1505
    %v1508 = vmul.f32 %v1498, %v1506
    %v1509 = vpack.c.bf16 %v1508, %v1507
    %1510 = vrot.lane.b32.xlu0 %v1182, 48
    %v1511 = vpop.permute.xlu0 %1510
    %v1514 = vsel %vm330, %v1509, 0
    %1516 = vmatprep.subr.bf16.mxu0 0
    %1517 = vmatpush1.bf16.msra.mxu0 %v1511
    %1518 = vmatprep.subr.bf16.mxu0 0
    %1519 = vmatpush1.bf16.msra.mxu0 0
    %1520 = vmatprep.subr.bf16.mxu0 0
    %1521 = vmatpush1.bf16.msra.mxu0 0
    %1522 = vmatprep.subr.bf16.mxu0 0
    %1523 = vmatpush1.bf16.msra.mxu0 0
    %1524 = vmatprep.subr.bf16.mxu0 0
    %1525 = vmatpush1.bf16.msra.mxu0 0
    %1526 = vmatprep.subr.bf16.mxu0 0
    %1527 = vmatpush1.bf16.msra.mxu0 0
    %1528 = vmatprep.subr.bf16.mxu0 0
    %1529 = vmatpush1.bf16.msra.mxu0 0
    %1530 = vmatprep.subr.bf16.mxu0 0
    %1531 = vmatpush1.bf16.msra.mxu0 0
    %1532 = vmatprep.subr.bf16.mxu0 0
    %1533 = vmatpush1.bf16.msra.mxu0 0
    %1534 = vmatprep.subr.bf16.mxu0 0
    %1535 = vmatpush1.bf16.msra.mxu0 0
    %1536 = vmatprep.subr.bf16.mxu0 0
    %1537 = vmatpush1.bf16.msra.mxu0 0
    %1538 = vmatprep.subr.bf16.mxu0 0
    %1539 = vmatpush1.bf16.msra.mxu0 0
    %1540 = vmatprep.subr.bf16.mxu0 0
    %1541 = vmatpush1.bf16.msra.mxu0 0
    %1542 = vmatprep.subr.bf16.mxu0 0
    %1543 = vmatpush1.bf16.msra.mxu0 0
    %1544 = vmatprep.subr.bf16.mxu0 0
    %1545 = vmatpush1.bf16.msra.mxu0 0
    %1546 = vmatprep.subr.bf16.mxu0 0
    %1547 = vmatpush1.bf16.msra.mxu0 0
    %1548 = vmatprep.mubr.bf16.mxu0 0
    %1549 = vmatmul.mubr.bf16.gmra.mrb[0].mxu0 %v1514
    %v1550 = vpop.f32.mrb[0].mxu0
    %v1551 = vadd.f32 0.0, %v1550
    %v1552 = vpop.f32.mrb[0].mxu0
    %v1553 = vpop.f32.mrb[0].mxu0
    %v1554 = vadd.f32 0.0, %v1553
    %v1555 = vpop.f32.mrb[0].mxu0
    %1556 = vdwg.mxu0
    %1557 = vrot.lane.b32.xlu0 %v1182, 104
    %v1558 = vpop.permute.xlu0 %1557
    %1559 = vrot.lane.b32.xlu0 %v1182, 72
    %v1560 = vpop.permute.xlu0 %1559
    %v1562 = vsel %vm278, %v1558, 0
    %v1565 = vsel %vm278, %v1560, 0
    %1567 = vmatprep.subr.bf16.mxu0 0
    %1568 = vmatpush1.bf16.xpose.msra.mxu0 %v1565
    %1569 = vmatprep.subr.bf16.mxu0 0
    %1570 = vmatpush1.bf16.xpose.msra.mxu0 0
    %1571 = vmatprep.subr.bf16.mxu0 0
    %1572 = vmatpush1.bf16.xpose.msra.mxu0 0
    %1573 = vmatprep.subr.bf16.mxu0 0
    %1574 = vmatpush1.bf16.xpose.msra.mxu0 0
    %1575 = vmatprep.subr.bf16.mxu0 0
    %1576 = vmatpush1.bf16.xpose.msra.mxu0 0
    %1577 = vmatprep.subr.bf16.mxu0 0
    %1578 = vmatpush1.bf16.xpose.msra.mxu0 0
    %1579 = vmatprep.subr.bf16.mxu0 0
    %1580 = vmatpush1.bf16.xpose.msra.mxu0 0
    %1581 = vmatprep.subr.bf16.mxu0 0
    %1582 = vmatpush1.bf16.xpose.msra.mxu0 0
    %1583 = vmatprep.subr.bf16.mxu0 0
    %1584 = vmatpush1.bf16.xpose.msra.mxu0 0
    %1585 = vmatprep.subr.bf16.mxu0 0
    %1586 = vmatpush1.bf16.xpose.msra.mxu0 0
    %1587 = vmatprep.subr.bf16.mxu0 0
    %1588 = vmatpush1.bf16.xpose.msra.mxu0 0
    %1589 = vmatprep.subr.bf16.mxu0 0
    %1590 = vmatpush1.bf16.xpose.msra.mxu0 0
    %1591 = vmatprep.subr.bf16.mxu0 0
    %1592 = vmatpush1.bf16.xpose.msra.mxu0 0
    %1593 = vmatprep.subr.bf16.mxu0 0
    %1594 = vmatpush1.bf16.xpose.msra.mxu0 0
    %1595 = vmatprep.subr.bf16.mxu0 0
    %1596 = vmatpush1.bf16.xpose.msra.mxu0 0
    %1597 = vmatprep.subr.bf16.mxu0 0
    %1598 = vmatpush1.bf16.xpose.msra.mxu0 0
    %1599 = vmatprep.mubr.bf16.mxu0 0
    %1600 = vmatmul.mubr.bf16.gmra.mrb[0].mxu0 %v1562
    %v1601 = vpop.f32.mrb[0].mxu0
    %v1602 = vadd.f32 0.0, %v1601
    %v1603 = vpop.f32.mrb[0].mxu0
    %v1604 = vpop.f32.mrb[0].mxu0
    %v1605 = vadd.f32 0.0, %v1604
    %v1606 = vpop.f32.mrb[0].mxu0
    %1607 = vdwg.mxu0
    %v1608 = vmul.f32 %v1602, 0.35355338
    %v1609 = vmul.f32 %v1605, 0.35355338
    %v1610 = vadd.f32 %v1608, %v207
    %v1611 = vadd.f32 %v1609, %v208
    %v1612 = vsel %vm330, %v1610, -inf
    %1613 = vmax.xlane.f32.xlu0 %v1612
    %v1614 = vpop.xlane.xlu0 %1613
    %v1615 = vsel %vm330, %v1611, -inf
    %1616 = vmax.xlane.f32.xlu0 %v1615
    %v1617 = vpop.xlane.xlu0 %1616
    %v1618 = vsub.f32 %v1610, %v1614
    %v1619 = vsub.f32 %v1611, %v1617
    %v1620 = vmul.f32 %v1618, 1.442695
    %v1621 = vpow.pop %v1620
    %v1622 = vmul.f32 %v1619, 1.442695
    %v1623 = vpow.pop %v1622
    %v1624 = vsel %vm330, %v1621, 0.0
    %1625 = vadd.xlane.f32.xlu0 %v1624
    %v1626 = vpop.xlane.xlu0 %1625
    %v1627 = vsel %vm330, %v1623, 0.0
    %1628 = vadd.xlane.f32.xlu0 %v1627
    %v1629 = vpop.xlane.xlu0 %1628
    %v1630 = vrcp.pop %v1626
    %v1631 = vrcp.pop %v1629
    %v1632 = vmul.f32 %v1621, %v1630
    %v1633 = vmul.f32 %v1623, %v1631
    %v1634 = vpack.c.bf16 %v1633, %v1632
    %1635 = vrot.lane.b32.xlu0 %v1182, 40
    %v1636 = vpop.permute.xlu0 %1635
    %v1639 = vsel %vm330, %v1634, 0
    %1641 = vmatprep.subr.bf16.mxu0 0
    %1642 = vmatpush1.bf16.msra.mxu0 %v1636
    %1643 = vmatprep.subr.bf16.mxu0 0
    %1644 = vmatpush1.bf16.msra.mxu0 0
    %1645 = vmatprep.subr.bf16.mxu0 0
    %1646 = vmatpush1.bf16.msra.mxu0 0
    %1647 = vmatprep.subr.bf16.mxu0 0
    %1648 = vmatpush1.bf16.msra.mxu0 0
    %1649 = vmatprep.subr.bf16.mxu0 0
    %1650 = vmatpush1.bf16.msra.mxu0 0
    %1651 = vmatprep.subr.bf16.mxu0 0
    %1652 = vmatpush1.bf16.msra.mxu0 0
    %1653 = vmatprep.subr.bf16.mxu0 0
    %1654 = vmatpush1.bf16.msra.mxu0 0
    %1655 = vmatprep.subr.bf16.mxu0 0
    %1656 = vmatpush1.bf16.msra.mxu0 0
    %1657 = vmatprep.subr.bf16.mxu0 0
    %1658 = vmatpush1.bf16.msra.mxu0 0
    %1659 = vmatprep.subr.bf16.mxu0 0
    %1660 = vmatpush1.bf16.msra.mxu0 0
    %1661 = vmatprep.subr.bf16.mxu0 0
    %1662 = vmatpush1.bf16.msra.mxu0 0
    %1663 = vmatprep.subr.bf16.mxu0 0
    %1664 = vmatpush1.bf16.msra.mxu0 0
    %1665 = vmatprep.subr.bf16.mxu0 0
    %1666 = vmatpush1.bf16.msra.mxu0 0
    %1667 = vmatprep.subr.bf16.mxu0 0
    %1668 = vmatpush1.bf16.msra.mxu0 0
    %1669 = vmatprep.subr.bf16.mxu0 0
    %1670 = vmatpush1.bf16.msra.mxu0 0
    %1671 = vmatprep.subr.bf16.mxu0 0
    %1672 = vmatpush1.bf16.msra.mxu0 0
    %1673 = vmatprep.mubr.bf16.mxu0 0
    %1674 = vmatmul.mubr.bf16.gmra.mrb[0].mxu0 %v1639
    %v1675 = vpop.f32.mrb[0].mxu0
    %v1676 = vadd.f32 0.0, %v1675
    %v1677 = vpop.f32.mrb[0].mxu0
    %v1678 = vpop.f32.mrb[0].mxu0
    %v1679 = vadd.f32 0.0, %v1678
    %v1680 = vpop.f32.mrb[0].mxu0
    %1681 = vdwg.mxu0
    %1684 = vrot.lane.b32.xlu0 %v1426, 8
    %v1685 = vpop.permute.xlu0 %1684
    %1686 = vrot.lane.b32.xlu0 %v1429, 8
    %v1687 = vpop.permute.xlu0 %1686
    %1692 = vrot.lane.b32.xlu0 %v1551, 16
    %v1693 = vpop.permute.xlu0 %1692
    %1694 = vrot.lane.b32.xlu0 %v1554, 16
    %v1695 = vpop.permute.xlu0 %1694
    %1700 = vrot.lane.b32.xlu0 %v1676, 24
    %v1701 = vpop.permute.xlu0 %1700
    %1702 = vrot.lane.b32.xlu0 %v1679, 24
    %v1703 = vpop.permute.xlu0 %1702
    %v1706 = vsel %vm278, %v1301, %v1685
    %v1707 = vsel %vm278, %v1304, %v1687
    %v1708 = vsel %vm330, %v1706, %v1693
    %v1709 = vsel %vm330, %v1707, %v1695
    %v1710 = vsel %vm804, %v1708, %v1701
    %v1711 = vsel %vm804, %v1709, %v1703
    %v1712 = vpack.c.bf16 %v1711, %v1710
    %s1713 = scalar_lea.vmem %s3, 16
    %v1714 = vld [vmem:[%s1713] sm:$0xf]
    %v1715 = vld [vmem:[%s1713 + $0x4] sm:$0xf]
    %v1716 = vld [vmem:[%s1713 + $0x8] sm:$0xf]
    %v1717 = vld [vmem:[%s1713 + $0xc] sm:$0xf]
    %v1718 = vlaneseq
    %v1719 = vshrl.u32 %v1718, 7
    %v1720 = vsub.s32 5, %v1719
    %v1721 = vrot.slane %v34, %v1720
    %v1726 = vunpack.c.l.b16 %v1714
    %v1727 = vunpack.c.l.b16 %v1715
    %v1728 = vunpack.c.l.b16 %v1716
    %v1729 = vunpack.c.l.b16 %v1717
    %v1730 = vpack.c.b16 %v1727, %v1726
    %v1731 = vpack.c.b16 %v1729, %v1728
    %v1735 = vsel %vm155, %v1712, 0
    %1737 = vmatprep.subr.bf16.mxu0 0
    %1738 = vmatpush1.bf16.msra.mxu0 %v1730
    %1739 = vmatprep.subr.bf16.mxu0 0
    %1740 = vmatpush1.bf16.msra.mxu0 %v1731
    %1741 = vmatprep.subr.bf16.mxu0 0
    %1742 = vmatpush1.bf16.msra.mxu0 0
    %1743 = vmatprep.subr.bf16.mxu0 0
    %1744 = vmatpush1.bf16.msra.mxu0 0
    %1745 = vmatprep.subr.bf16.mxu0 0
    %1746 = vmatpush1.bf16.msra.mxu0 0
    %1747 = vmatprep.subr.bf16.mxu0 0
    %1748 = vmatpush1.bf16.msra.mxu0 0
    %1749 = vmatprep.subr.bf16.mxu0 0
    %1750 = vmatpush1.bf16.msra.mxu0 0
    %1751 = vmatprep.subr.bf16.mxu0 0
    %1752 = vmatpush1.bf16.msra.mxu0 0
    %1753 = vmatprep.subr.bf16.mxu0 0
    %1754 = vmatpush1.bf16.msra.mxu0 0
    %1755 = vmatprep.subr.bf16.mxu0 0
    %1756 = vmatpush1.bf16.msra.mxu0 0
    %1757 = vmatprep.subr.bf16.mxu0 0
    %1758 = vmatpush1.bf16.msra.mxu0 0
    %1759 = vmatprep.subr.bf16.mxu0 0
    %1760 = vmatpush1.bf16.msra.mxu0 0
    %1761 = vmatprep.subr.bf16.mxu0 0
    %1762 = vmatpush1.bf16.msra.mxu0 0
    %1763 = vmatprep.subr.bf16.mxu0 0
    %1764 = vmatpush1.bf16.msra.mxu0 0
    %1765 = vmatprep.subr.bf16.mxu0 0
    %1766 = vmatpush1.bf16.msra.mxu0 0
    %1767 = vmatprep.subr.bf16.mxu0 0
    %1768 = vmatpush1.bf16.msra.mxu0 0
    %1769 = vmatprep.mubr.bf16.mxu0 0
    %1770 = vmatmul.mubr.bf16.gmra.mrb[0].mxu0 %v1735
    %v1771 = vpop.f32.mrb[0].mxu0
    %v1772 = vadd.f32 %v1721, %v1771
    %v1773 = vpop.f32.mrb[0].mxu0
    %v1774 = vpop.f32.mrb[0].mxu0
    %v1775 = vadd.f32 %v1721, %v1774
    %v1776 = vpop.f32.mrb[0].mxu0
    %1777 = vdwg.mxu0
    %v1778 = vadd.f32 %v1772, %v1114
    %v1779 = vadd.f32 %v1775, %v1115
    %v1780 = vsel %vm155, %v1778, 0.0
    %1781 = vadd.xlane.f32.xlu0 %v1780
    %v1782 = vpop.xlane.xlu0 %1781
    %v1783 = vsel %vm155, %v1779, 0.0
    %1784 = vadd.xlane.f32.xlu0 %v1783
    %v1785 = vpop.xlane.xlu0 %1784
    %v1786 = vmul.f32 %v1782, %v162
    %v1787 = vmul.f32 %v1785, %v162
    %v1788 = vsub.f32 %v1778, %v1786
    %v1789 = vsub.f32 %v1779, %v1787
    %v1790 = vmul.f32 %v1788, %v1788
    %v1791 = vmul.f32 %v1789, %v1789
    %v1792 = vsel %vm155, %v1790, 0.0
    %1793 = vadd.xlane.f32.xlu0 %v1792
    %v1794 = vpop.xlane.xlu0 %1793
    %v1795 = vsel %vm155, %v1791, 0.0
    %1796 = vadd.xlane.f32.xlu0 %v1795
    %v1797 = vpop.xlane.xlu0 %1796
    %v1798 = vmul.f32 %v1794, %v162
    %v1799 = vmul.f32 %v1797, %v162
    %v1800 = vadd.f32 %v1798, 1e-12
    %v1801 = vadd.f32 %v1799, 1e-12
    %v1802 = vrsqrt.pop %v1800
    %v1803 = vrsqrt.pop %v1801
    %v1804 = vmul.f32 %v1788, %v1802
    %v1805 = vmul.f32 %v1789, %v1803
    %v1806 = vlaneseq
    %v1807 = vshrl.u32 %v1806, 7
    %v1808 = vsub.s32 6, %v1807
    %v1809 = vrot.slane %v34, %v1808
    %v1810 = vmul.f32 %v1804, %v1809
    %v1811 = vmul.f32 %v1805, %v1809
    %v1812 = vlaneseq
    %v1813 = vshrl.u32 %v1812, 7
    %v1814 = vsub.s32 7, %v1813
    %v1815 = vrot.slane %v34, %v1814
    %v1816 = vadd.f32 %v1810, %v1815
    %v1817 = vadd.f32 %v1811, %v1815
    %v1818 = vpack.c.bf16 %v1817, %v1816
    %s1819 = scalar_lea.vmem %s4, 16
    %v1820 = vld [vmem:[%s1819] sm:$0xf]
    %v1821 = vld [vmem:[%s1819 + $0x4] sm:$0xf]
    %v1822 = vld [vmem:[%s1819 + $0x8] sm:$0xf]
    %v1823 = vld [vmem:[%s1819 + $0xc] sm:$0xf]
    %v1824 = vlaneseq
    %v1825 = vshrl.u32 %v1824, 7
    %v1826 = vsub.s32 0, %v1825
    %v1827 = vrot.slane %v35, %v1826
    %v1832 = vunpack.c.l.b16 %v1820
    %v1833 = vunpack.c.l.b16 %v1821
    %v1834 = vunpack.c.l.b16 %v1822
    %v1835 = vunpack.c.l.b16 %v1823
    %v1836 = vpack.c.b16 %v1833, %v1832
    %v1837 = vpack.c.b16 %v1835, %v1834
    %v1841 = vsel %vm155, %v1818, 0
    %1843 = vmatprep.subr.bf16.mxu0 0
    %1844 = vmatpush1.bf16.msra.mxu0 %v1836
    %1845 = vmatprep.subr.bf16.mxu0 0
    %1846 = vmatpush1.bf16.msra.mxu0 %v1837
    %1847 = vmatprep.subr.bf16.mxu0 0
    %1848 = vmatpush1.bf16.msra.mxu0 0
    %1849 = vmatprep.subr.bf16.mxu0 0
    %1850 = vmatpush1.bf16.msra.mxu0 0
    %1851 = vmatprep.subr.bf16.mxu0 0
    %1852 = vmatpush1.bf16.msra.mxu0 0
    %1853 = vmatprep.subr.bf16.mxu0 0
    %1854 = vmatpush1.bf16.msra.mxu0 0
    %1855 = vmatprep.subr.bf16.mxu0 0
    %1856 = vmatpush1.bf16.msra.mxu0 0
    %1857 = vmatprep.subr.bf16.mxu0 0
    %1858 = vmatpush1.bf16.msra.mxu0 0
    %1859 = vmatprep.subr.bf16.mxu0 0
    %1860 = vmatpush1.bf16.msra.mxu0 0
    %1861 = vmatprep.subr.bf16.mxu0 0
    %1862 = vmatpush1.bf16.msra.mxu0 0
    %1863 = vmatprep.subr.bf16.mxu0 0
    %1864 = vmatpush1.bf16.msra.mxu0 0
    %1865 = vmatprep.subr.bf16.mxu0 0
    %1866 = vmatpush1.bf16.msra.mxu0 0
    %1867 = vmatprep.subr.bf16.mxu0 0
    %1868 = vmatpush1.bf16.msra.mxu0 0
    %1869 = vmatprep.subr.bf16.mxu0 0
    %1870 = vmatpush1.bf16.msra.mxu0 0
    %1871 = vmatprep.subr.bf16.mxu0 0
    %1872 = vmatpush1.bf16.msra.mxu0 0
    %1873 = vmatprep.subr.bf16.mxu0 0
    %1874 = vmatpush1.bf16.msra.mxu0 0
    %1875 = vmatprep.mubr.bf16.mxu0 0
    %1876 = vmatmul.mubr.bf16.gmra.mrb[0].mxu0 %v1841
    %v1877 = vpop.f32.mrb[0].mxu0
    %v1878 = vadd.f32 %v1827, %v1877
    %v1879 = vpop.f32.mrb[0].mxu0
    %v1880 = vpop.f32.mrb[0].mxu0
    %v1881 = vadd.f32 %v1827, %v1880
    %v1882 = vpop.f32.mrb[0].mxu0
    %1883 = vdwg.mxu0
    %v1884 = vmul.f32 %v1878, 0.5
    %v1885 = vmul.f32 %v1881, 0.5
    %v1886 = vmul.f32 %v1878, 0.044715
    %v1887 = vmul.f32 %v1881, 0.044715
    %v1888 = vmul.f32 %v1886, %v1878
    %v1889 = vmul.f32 %v1887, %v1881
    %v1890 = vmul.f32 %v1888, %v1878
    %v1891 = vmul.f32 %v1889, %v1881
    %v1892 = vadd.f32 %v1878, %v1890
    %v1893 = vadd.f32 %v1881, %v1891
    %v1894 = vmul.f32 %v1892, 0.7978846
    %v1895 = vmul.f32 %v1893, 0.7978846
    %v1896 = vtanh.pop %v1894
    %v1897 = vtanh.pop %v1895
    %v1898 = vadd.f32 %v1896, 1.0
    %v1899 = vadd.f32 %v1897, 1.0
    %v1900 = vmul.f32 %v1884, %v1898
    %v1901 = vmul.f32 %v1885, %v1899
    %v1902 = vpack.c.bf16 %v1901, %v1900
    %s1903 = scalar_lea.vmem %s5, 32
    %v1904 = vld [vmem:[%s1903] sm:$0xf]
    %v1905 = vld [vmem:[%s1903 + $0x4] sm:$0xf]
    %v1906 = vld [vmem:[%s1903 + $0x8] sm:$0xf]
    %v1907 = vld [vmem:[%s1903 + $0xc] sm:$0xf]
    %v1908 = vld [vmem:[%s1903 + $0x10] sm:$0xf]
    %v1909 = vld [vmem:[%s1903 + $0x14] sm:$0xf]
    %v1910 = vld [vmem:[%s1903 + $0x18] sm:$0xf]
    %v1911 = vld [vmem:[%s1903 + $0x1c] sm:$0xf]
    %v1912 = vlaneseq
    %v1913 = vshrl.u32 %v1912, 7
    %v1914 = vsub.s32 1, %v1913
    %v1915 = vrot.slane %v35, %v1914
    %v1924 = vunpack.c.l.b16 %v1904
    %v1925 = vunpack.c.l.b16 %v1905
    %v1926 = vunpack.c.l.b16 %v1906
    %v1927 = vunpack.c.l.b16 %v1907
    %v1928 = vunpack.c.l.b16 %v1908
    %v1929 = vunpack.c.l.b16 %v1909
    %v1930 = vunpack.c.l.b16 %v1910
    %v1931 = vunpack.c.l.b16 %v1911
    %v1932 = vpack.c.b16 %v1925, %v1924
    %v1933 = vpack.c.b16 %v1927, %v1926
    %v1934 = vpack.c.b16 %v1929, %v1928
    %v1935 = vpack.c.b16 %v1931, %v1930
    %v1941 = vsel %vm67, %v1902, 0
    %1943 = vmatprep.subr.bf16.mxu0 0
    %1944 = vmatpush1.bf16.msra.mxu0 %v1932
    %1945 = vmatprep.subr.bf16.mxu0 0
    %1946 = vmatpush1.bf16.msra.mxu0 %v1933
    %1947 = vmatprep.subr.bf16.mxu0 0
    %1948 = vmatpush1.bf16.msra.mxu0 %v1934
    %1949 = vmatprep.subr.bf16.mxu0 0
    %1950 = vmatpush1.bf16.msra.mxu0 %v1935
    %1951 = vmatprep.subr.bf16.mxu0 0
    %1952 = vmatpush1.bf16.msra.mxu0 0
    %1953 = vmatprep.subr.bf16.mxu0 0
    %1954 = vmatpush1.bf16.msra.mxu0 0
    %1955 = vmatprep.subr.bf16.mxu0 0
    %1956 = vmatpush1.bf16.msra.mxu0 0
    %1957 = vmatprep.subr.bf16.mxu0 0
    %1958 = vmatpush1.bf16.msra.mxu0 0
    %1959 = vmatprep.subr.bf16.mxu0 0
    %1960 = vmatpush1.bf16.msra.mxu0 0
    %1961 = vmatprep.subr.bf16.mxu0 0
    %1962 = vmatpush1.bf16.msra.mxu0 0
    %1963 = vmatprep.subr.bf16.mxu0 0
    %1964 = vmatpush1.bf16.msra.mxu0 0
    %1965 = vmatprep.subr.bf16.mxu0 0
    %1966 = vmatpush1.bf16.msra.mxu0 0
    %1967 = vmatprep.subr.bf16.mxu0 0
    %1968 = vmatpush1.bf16.msra.mxu0 0
    %1969 = vmatprep.subr.bf16.mxu0 0
    %1970 = vmatpush1.bf16.msra.mxu0 0
    %1971 = vmatprep.subr.bf16.mxu0 0
    %1972 = vmatpush1.bf16.msra.mxu0 0
    %1973 = vmatprep.subr.bf16.mxu0 0
    %1974 = vmatpush1.bf16.msra.mxu0 0
    %1975 = vmatprep.mubr.bf16.mxu0 0
    %1976 = vmatmul.mubr.bf16.gmra.mrb[0].mxu0 %v1941
    %v1977 = vpop.f32.mrb[0].mxu0
    %v1978 = vadd.f32 %v1915, %v1977
    %v1979 = vpop.f32.mrb[0].mxu0
    %v1980 = vpop.f32.mrb[0].mxu0
    %v1981 = vadd.f32 %v1915, %v1980
    %v1982 = vpop.f32.mrb[0].mxu0
    %1983 = vdwg.mxu0
    %v1984 = vadd.f32 %v1978, %v1816
    %v1985 = vadd.f32 %v1981, %v1817
    %v1986 = vsel %vm155, %v1984, 0.0
    %1987 = vadd.xlane.f32.xlu0 %v1986
    %v1988 = vpop.xlane.xlu0 %1987
    %v1989 = vsel %vm155, %v1985, 0.0
    %1990 = vadd.xlane.f32.xlu0 %v1989
    %v1991 = vpop.xlane.xlu0 %1990
    %v1992 = vmul.f32 %v1988, %v162
    %v1993 = vmul.f32 %v1991, %v162
    %v1994 = vsub.f32 %v1984, %v1992
    %v1995 = vsub.f32 %v1985, %v1993
    %v1996 = vmul.f32 %v1994, %v1994
    %v1997 = vmul.f32 %v1995, %v1995
    %v1998 = vsel %vm155, %v1996, 0.0
    %1999 = vadd.xlane.f32.xlu0 %v1998
    %v2000 = vpop.xlane.xlu0 %1999
    %v2001 = vsel %vm155, %v1997, 0.0
    %2002 = vadd.xlane.f32.xlu0 %v2001
    %v2003 = vpop.xlane.xlu0 %2002
    %v2004 = vmul.f32 %v2000, %v162
    %v2005 = vmul.f32 %v2003, %v162
    %v2006 = vadd.f32 %v2004, 1e-12
    %v2007 = vadd.f32 %v2005, 1e-12
    %v2008 = vrsqrt.pop %v2006
    %v2009 = vrsqrt.pop %v2007
    %v2010 = vmul.f32 %v1994, %v2008
    %v2011 = vmul.f32 %v1995, %v2009
    %v2012 = vlaneseq
    %v2013 = vshrl.u32 %v2012, 7
    %v2014 = vsub.s32 2, %v2013
    %v2015 = vrot.slane %v35, %v2014
    %v2016 = vmul.f32 %v2010, %v2015
    %v2017 = vmul.f32 %v2011, %v2015
    %v2018 = vlaneseq
    %v2019 = vshrl.u32 %v2018, 7
    %v2020 = vsub.s32 3, %v2019
    %v2021 = vrot.slane %v35, %v2020
    %v2022 = vadd.f32 %v2016, %v2021
    %v2023 = vadd.f32 %v2017, %v2021
    %v2024 = vpack.c.bf16 %v2023, %v2022
    %v2025 = vld [vmem:[%s6] sm:$0xf]
    %v2026 = vld [vmem:[%s6 + $0x4] sm:$0xf]
    %v2027 = vld [vmem:[%s6 + $0x8] sm:$0xf]
    %v2028 = vld [vmem:[%s6 + $0xc] sm:$0xf]
    %v2029 = vlaneseq
    %v2030 = vshrl.u32 %v2029, 7
    %v2031 = vsub.s32 3, %v2030
    %v2032 = vrot.slane %v31, %v2031
    %v2037 = vunpack.c.l.b16 %v2025
    %v2038 = vunpack.c.l.b16 %v2026
    %v2039 = vunpack.c.l.b16 %v2027
    %v2040 = vunpack.c.l.b16 %v2028
    %v2041 = vpack.c.b16 %v2038, %v2037
    %v2042 = vpack.c.b16 %v2040, %v2039
    %v2046 = vsel %vm155, %v2024, 0
    %2048 = vmatprep.subr.bf16.mxu0 0
    %2049 = vmatpush1.bf16.msra.mxu0 %v2041
    %2050 = vmatprep.subr.bf16.mxu0 0
    %2051 = vmatpush1.bf16.msra.mxu0 %v2042
    %2052 = vmatprep.subr.bf16.mxu0 0
    %2053 = vmatpush1.bf16.msra.mxu0 0
    %2054 = vmatprep.subr.bf16.mxu0 0
    %2055 = vmatpush1.bf16.msra.mxu0 0
    %2056 = vmatprep.subr.bf16.mxu0 0
    %2057 = vmatpush1.bf16.msra.mxu0 0
    %2058 = vmatprep.subr.bf16.mxu0 0
    %2059 = vmatpush1.bf16.msra.mxu0 0
    %2060 = vmatprep.subr.bf16.mxu0 0
    %2061 = vmatpush1.bf16.msra.mxu0 0
    %2062 = vmatprep.subr.bf16.mxu0 0
    %2063 = vmatpush1.bf16.msra.mxu0 0
    %2064 = vmatprep.subr.bf16.mxu0 0
    %2065 = vmatpush1.bf16.msra.mxu0 0
    %2066 = vmatprep.subr.bf16.mxu0 0
    %2067 = vmatpush1.bf16.msra.mxu0 0
    %2068 = vmatprep.subr.bf16.mxu0 0
    %2069 = vmatpush1.bf16.msra.mxu0 0
    %2070 = vmatprep.subr.bf16.mxu0 0
    %2071 = vmatpush1.bf16.msra.mxu0 0
    %2072 = vmatprep.subr.bf16.mxu0 0
    %2073 = vmatpush1.bf16.msra.mxu0 0
    %2074 = vmatprep.subr.bf16.mxu0 0
    %2075 = vmatpush1.bf16.msra.mxu0 0
    %2076 = vmatprep.subr.bf16.mxu0 0
    %2077 = vmatpush1.bf16.msra.mxu0 0
    %2078 = vmatprep.subr.bf16.mxu0 0
    %2079 = vmatpush1.bf16.msra.mxu0 0
    %2080 = vmatprep.mubr.bf16.mxu0 0
    %2081 = vmatmul.mubr.bf16.gmra.mrb[0].mxu0 %v2046
    %v2082 = vpop.f32.mrb[0].mxu0
    %v2083 = vadd.f32 %v2032, %v2082
    %v2084 = vpop.f32.mrb[0].mxu0
    %v2085 = vpop.f32.mrb[0].mxu0
    %v2086 = vadd.f32 %v2032, %v2085
    %v2087 = vpop.f32.mrb[0].mxu0
    %2088 = vdwg.mxu0
    %2089 = vmax.xlane.f32.xlu0 %v2083
    %v2090 = vpop.xlane.xlu0 %2089
    %2091 = vmax.xlane.f32.xlu0 %v2086
    %v2092 = vpop.xlane.xlu0 %2091
    %v2093 = vsub.f32 %v2083, %v2090
    %v2094 = vsub.f32 %v2086, %v2092
    %v2095 = vmul.f32 %v2093, 1.442695
    %v2096 = vpow.pop %v2095
    %v2097 = vmul.f32 %v2094, 1.442695
    %v2098 = vpow.pop %v2097
    %2099 = vadd.xlane.f32.xlu0 %v2096
    %v2100 = vpop.xlane.xlu0 %2099
    %2101 = vadd.xlane.f32.xlu0 %v2098
    %v2102 = vpop.xlane.xlu0 %2101
    %v2103 = vrcp.pop %v2100
    %v2104 = vmul.f32 %v2096, %v2103
    %v2105 = vrcp.pop %v2102
    %v2106 = vmul.f32 %v2098, %v2105
    %2107 = vst [vmem:[#allocation2] sm:$0xff] %v2104
    %2108 = vst [vmem:[#allocation2 + $0x8] sm:$0xff] %v2106
    // Predicated region
    $region34: #{lm_infer.1} parent=1 // pred_check
      _
    $region35: #{lm_infer.1} parent=1 // pred_check_branch
      %2110 = sbr.rel (0) target = $region37
    $region36: #{lm_infer.1} parent=1 // pred_region
      %s2112 = ssub.s32 256, 256
      %2113 = vsyncadd [#allocation3], %s2112
      %s2114 = sshll.u32 [#allocation2], 4
      %s2115 = int_to_ptr.vmem [resolvable:$true] %s2114
      %2120 = dma.vmem_to_hbm [thread:$0]  %s2115, 256, %s8, [#allocation3], 128, 128, 8
    $region37: #{lm_infer.1} parent=1 // pred_fallthru
      _
    // Predicated region
    $region38: #{lm_infer.1} parent=1 // pred_check
      _
    $region39: #{lm_infer.1} parent=1 // pred_check_branch
      %2122 = sbr.rel (0) target = $region41
    $region40: #{lm_infer.1} parent=1 // pred_region
      %2123 = dma.done [#allocation3], 256
    $region41: #{lm_infer.1} parent=1 // pred_fallthru
      _
    %2124 = vsyncpa [#allocation3], 1

</llo_original>
